<compile_context>
chip_gen: v6e
topology: v6e:2x2x1
jax: 0.10.0
libtpu: 0.0.40
codegen_flags: <defaults>
</compile_context>

<pallas_src>
import jax
import jax.numpy as jnp
from jax.experimental import pallas as pl
from jax.experimental.pallas import tpu as pltpu

NUM_CLASSES = 13
FEAT_C = 2048
MAX_TILE_N = 32  # batch rows per grid step (16 MiB double-buffered bf16 feats)


def head_kernel(x_ref, w_hi_ref, w_lo_ref, b_ref, o_ref):
    # x_ref : (TN, HW, C)   bf16 feature tile, channels on the lane axis
    # w_hi_ref, w_lo_ref : (C, 13) bf16 hi/lo split of the f32 weight with the
    #                      1/HW avg-pool scale folded in
    # b_ref : (1, 13) f32 bias
    # o_ref : (TN, 1, 13) f32 log-probs
    tn, hw, c = x_ref.shape

    # View the tile as a 2-D matmul LHS. HW (=64) is a multiple of the bf16
    # sublane tile (16), so merging (TN, HW) is a no-op relayout.
    x2 = x_ref[...].reshape(tn * hw, c)

    # Linear(2048, 13) with the spatial reduction pushed onto the MXU:
    # (TN*HW, C) @ (C, 13), native bf16 inputs, f32 accumulation, two passes
    # (hi + lo weight halves) to recover f32 weight precision.
    y = jnp.dot(x2, w_hi_ref[...], preferred_element_type=jnp.float32)
    y = y + jnp.dot(x2, w_lo_ref[...], preferred_element_type=jnp.float32)

    # AdaptiveAvgPool2d((1,1)): the 1/HW scale is folded into the weight, so
    # the remaining spatial reduce is a cheap 13-lane-wide sublane sum.
    logits = jnp.sum(y.reshape(tn, hw, NUM_CLASSES), axis=1) + b_ref[...]

    # LogSoftmax(dim=1). Rows of a partially-full final batch tile hold
    # garbage and may go Inf/NaN here; that stays confined per-row (neither
    # the matmul nor the HW-sum mixes batch rows) and is masked on writeback.
    m = jnp.max(logits, axis=1, keepdims=True)
    lse = jnp.log(jnp.sum(jnp.exp(logits - m), axis=1, keepdims=True)) + m
    o_ref[...] = (logits - lse).reshape(tn, 1, NUM_CLASSES)


def prepare_head_params(w, b, hw):
    """One-time param prep: fold the 1/HW avg-pool scale into the weight and
    split it into a bf16 hi/lo pair (w_hi + w_lo == f32 weight to ~2^-17)."""
    w_scaled = w.astype(jnp.float32) * (1.0 / float(hw))            # (C, 13)
    w_hi = w_scaled.astype(jnp.bfloat16)
    w_lo = (w_scaled - w_hi.astype(jnp.float32)).astype(jnp.bfloat16)
    b_row = b.astype(jnp.float32).reshape(1, NUM_CLASSES)           # (1, 13)
    return w_hi, w_lo, b_row


def inception_head(feat_nhwc, w_hi, w_lo, b_row, *, tile_n=None):
    """feat_nhwc: (N, H, W, C) backbone features, channels-last (bf16 or f32).
    w_hi/w_lo/b_row from prepare_head_params. Returns (N, 13) f32 log-probs."""
    N, H, W, C = feat_nhwc.shape
    hw = H * W
    # Free metadata reshape (adjacent dims merged, channels stay last): no
    # HBM copy, unlike the old NCHW->NHWC transpose.
    x = feat_nhwc.reshape(N, hw, C)

    if tile_n is None:
        # >= 2 grid steps so the "parallel" batch axis feeds both of v7x's
        # TensorCores even at small N; cap the tile for the VMEM budget.
        tile_n = min(MAX_TILE_N, max(1, pl.cdiv(N, 2)))
    grid = (pl.cdiv(N, tile_n),)

    out3 = pl.pallas_call(
        head_kernel,
        out_shape=jax.ShapeDtypeStruct((N, 1, NUM_CLASSES), jnp.float32),
        grid=grid,
        in_specs=[
            pl.BlockSpec((tile_n, hw, C), lambda i: (i, 0, 0)),
            pl.BlockSpec((C, NUM_CLASSES), lambda i: (0, 0)),   # VMEM-resident
            pl.BlockSpec((C, NUM_CLASSES), lambda i: (0, 0)),   # VMEM-resident
            pl.BlockSpec((1, NUM_CLASSES), lambda i: (0, 0)),   # VMEM-resident
        ],
        out_specs=pl.BlockSpec((tile_n, 1, NUM_CLASSES), lambda i: (i, 0, 0)),
        compiler_params=pltpu.CompilerParams(
            dimension_semantics=("parallel",),
            vmem_limit_bytes=40 * 1024 * 1024,
        ),
    )(x, w_hi, w_lo, b_row)
    return out3.reshape(N, NUM_CLASSES)


def inception_head_from_nchw(feat_nchw, w_hi, w_lo, b_row, *, tile_n=None):
    """Adapter for PyTorch-layout (N, C, H, W) features. The transpose costs an
    extra HBM round-trip of the feature map -- prefer emitting NHWC from the
    backbone and calling inception_head directly."""
    return inception_head(jnp.transpose(feat_nchw, (0, 2, 3, 1)),
                          w_hi, w_lo, b_row, tile_n=tile_n)


def reference_head(feat_nhwc, w, b):
    """Pure-JAX reference (f32) for correctness check."""
    pooled = jnp.mean(feat_nhwc.astype(jnp.float32), axis=(1, 2))    # (N, 2048)
    logits = jnp.dot(pooled, w.astype(jnp.float32),
                     precision=jax.lax.Precision.HIGHEST) + b.astype(jnp.float32)
    return jax.nn.log_softmax(logits, axis=1)


if __name__ == "__main__":
    key = jax.random.PRNGKey(0)
    k_x, k_w, k_b = jax.random.split(key, 3)

    # Feature map a TPU-native Inception-v3 backbone would emit for a small
    # batch: (batch=2, spatial=8x8, channels=2048), channels-last, bf16.
    N, H, W = 2, 8, 8
    feat = jax.random.normal(k_x, (N, H, W, FEAT_C), dtype=jnp.float32)
    feat = feat.astype(jnp.bfloat16)

    # Deterministic Linear(2048, 13) init (PyTorch-style uniform bounds).
    bound = 1.0 / (FEAT_C ** 0.5)
    w = jax.random.uniform(k_w, (FEAT_C, NUM_CLASSES), jnp.float32, -bound, bound)
    b = jax.random.uniform(k_b, (NUM_CLASSES,), jnp.float32, -bound, bound)

    w_hi, w_lo, b_row = prepare_head_params(w, b, H * W)

    out = jax.block_until_ready(inception_head(feat, w_hi, w_lo, b_row))
    ref = jax.block_until_ready(reference_head(feat, w, b))

    assert out.shape == (N, NUM_CLASSES), out.shape
    err = jnp.max(jnp.abs(out - ref))
    assert jnp.allclose(out, ref, atol=1e-4, rtol=1e-4), f"max abs err = {err}"
    print("KERNEL_OK")
</pallas_src>

<mosaic_0001>
module attributes {stable_mosaic.version = 11 : i64} {
  func.func @head_kernel(%arg0: i32, %arg1: memref<1x64x2048xbf16, #tpu.memory_space<vmem>>, %arg2: memref<2048x13xbf16, #tpu.memory_space<vmem>>, %arg3: memref<2048x13xbf16, #tpu.memory_space<vmem>>, %arg4: memref<1x13xf32, #tpu.memory_space<vmem>>, %arg5: memref<1x1x13xf32, #tpu.memory_space<vmem>>) attributes {dimension_semantics = [#tpu.dimension_semantics<parallel>], iteration_bounds = array<i64: 2>, scalar_prefetch = 0 : i64, scratch_operands = 0 : i64, tpu.core_type = #tpu.core_type<tc>, window_params = [{transform_indices = @transform_0, window_bounds = array<i64: 1, 64, 2048>}, {pipeline_mode = #tpu.pipeline_mode<synchronous>, transform_indices = @transform_1, window_bounds = array<i64: 2048, 13>}, {pipeline_mode = #tpu.pipeline_mode<synchronous>, transform_indices = @transform_2, window_bounds = array<i64: 2048, 13>}, {pipeline_mode = #tpu.pipeline_mode<synchronous>, transform_indices = @transform_3, window_bounds = array<i64: 1, 13>}, {transform_indices = @transform_4, window_bounds = array<i64: 1, 1, 13>}]} {
    %c0 = arith.constant 0 : index
    %c0_0 = arith.constant 0 : index
    %c0_1 = arith.constant 0 : index
    %0 = vector.load %arg1[%c0, %c0_0, %c0_1] : memref<1x64x2048xbf16, #tpu.memory_space<vmem>>, vector<1x64x2048xbf16>
    %1 = vector.shape_cast %0 : vector<1x64x2048xbf16> to vector<64x2048xbf16>
    %c0_2 = arith.constant 0 : index
    %c0_3 = arith.constant 0 : index
    %2 = vector.load %arg2[%c0_2, %c0_3] : memref<2048x13xbf16, #tpu.memory_space<vmem>>, vector<2048x13xbf16>
    %cst = arith.constant dense<0.000000e+00> : vector<64x13xf32>
    %3 = tpu.matmul %1, %2, %cst {dimension_numbers = #tpu.dot_dimension_numbers<[1], [0], [0], [1], [0, 0, 1, 1], [], []>} : vector<64x2048xbf16>, vector<2048x13xbf16>, vector<64x13xf32> -> vector<64x13xf32>
    %c0_4 = arith.constant 0 : index
    %c0_5 = arith.constant 0 : index
    %4 = vector.load %arg3[%c0_4, %c0_5] : memref<2048x13xbf16, #tpu.memory_space<vmem>>, vector<2048x13xbf16>
    %cst_6 = arith.constant dense<0.000000e+00> : vector<64x13xf32>
    %5 = tpu.matmul %1, %4, %cst_6 {dimension_numbers = #tpu.dot_dimension_numbers<[1], [0], [0], [1], [0, 0, 1, 1], [], []>} : vector<64x2048xbf16>, vector<2048x13xbf16>, vector<64x13xf32> -> vector<64x13xf32>
    %6 = arith.addf %3, %5 : vector<64x13xf32>
    %7 = vector.shape_cast %6 : vector<64x13xf32> to vector<1x64x13xf32>
    %cst_7 = arith.constant dense<0.000000e+00> : vector<1x13xf32>
    %8 = vector.multi_reduction <add>, %7, %cst_7 [1] : vector<1x64x13xf32> to vector<1x13xf32>
    %c0_8 = arith.constant 0 : index
    %c0_9 = arith.constant 0 : index
    %9 = vector.load %arg4[%c0_8, %c0_9] : memref<1x13xf32, #tpu.memory_space<vmem>>, vector<1x13xf32>
    %10 = arith.addf %8, %9 : vector<1x13xf32>
    %cst_10 = arith.constant dense<0xFF800000> : vector<1xf32>
    %11 = vector.multi_reduction <maximumf>, %10, %cst_10 [1] : vector<1x13xf32> to vector<1xf32>
    %12 = vector.shape_cast %11 : vector<1xf32> to vector<1x1xf32>
    %13 = vector.broadcast %12 : vector<1x1xf32> to vector<1x13xf32>
    %14 = arith.subf %10, %13 : vector<1x13xf32>
    %15 = math.exp %14 : vector<1x13xf32>
    %cst_11 = arith.constant dense<0.000000e+00> : vector<1xf32>
    %16 = vector.multi_reduction <add>, %15, %cst_11 [1] : vector<1x13xf32> to vector<1xf32>
    %17 = vector.shape_cast %16 : vector<1xf32> to vector<1x1xf32>
    %18 = math.log %17 : vector<1x1xf32>
    %19 = arith.addf %18, %12 : vector<1x1xf32>
    %20 = vector.broadcast %19 : vector<1x1xf32> to vector<1x13xf32>
    %21 = arith.subf %10, %20 : vector<1x13xf32>
    %22 = vector.shape_cast %21 : vector<1x13xf32> to vector<1x1x13xf32>
    %c0_12 = arith.constant 0 : index
    %c0_13 = arith.constant 0 : index
    %c0_14 = arith.constant 0 : index
    %23 = vector.load %arg5[%c0_12, %c0_13, %c0_14] : memref<1x1x13xf32, #tpu.memory_space<vmem>>, vector<1x1x13xf32>
    tpu.vector_store %arg5[%c0_12, %c0_13, %c0_14], %22 {strides = array<i32>} : memref<1x1x13xf32, #tpu.memory_space<vmem>>, vector<1x1x13xf32>,
    return
  }
  func.func @transform_0(%arg0: i32) -> (i32, i32, i32) {
    %c0_i32 = arith.constant 0 : i32
    %c0_i32_0 = arith.constant 0 : i32
    %c0_i32_1 = arith.constant 0 : i32
    return %arg0, %c0_i32, %c0_i32_0 : i32, i32, i32
  }
  func.func @transform_1(%arg0: i32) -> (i32, i32) {
    %c0_i32 = arith.constant 0 : i32
    %c0_i32_0 = arith.constant 0 : i32
    %c0_i32_1 = arith.constant 0 : i32
    return %c0_i32, %c0_i32_0 : i32, i32
  }
  func.func @transform_2(%arg0: i32) -> (i32, i32) {
    %c0_i32 = arith.constant 0 : i32
    %c0_i32_0 = arith.constant 0 : i32
    %c0_i32_1 = arith.constant 0 : i32
    return %c0_i32, %c0_i32_0 : i32, i32
  }
  func.func @transform_3(%arg0: i32) -> (i32, i32) {
    %c0_i32 = arith.constant 0 : i32
    %c0_i32_0 = arith.constant 0 : i32
    %c0_i32_1 = arith.constant 0 : i32
    return %c0_i32, %c0_i32_0 : i32, i32
  }
  func.func @transform_4(%arg0: i32) -> (i32, i32, i32) {
    %c0_i32 = arith.constant 0 : i32
    %c0_i32_0 = arith.constant 0 : i32
    %c0_i32_1 = arith.constant 0 : i32
    return %arg0, %c0_i32, %c0_i32_0 : i32, i32, i32
  }
}

</mosaic_0001>

<llo_original>
// kernel: tpu_custom_call.1
$region0: #{tpu_custom_call.1}
  #allocation0 [shape = 'u32[]', space=smem, size = 0x4, offset = 0x4, fixed_abs, tag = 'smem constant byte address 0x4 - core index']
  #allocation1 [shape = 'u32[144,128]{1,0:T(1,128)}', space=vmem, size = 0x12000, scoped, tag = 'internal scratch']
  %s0 = inlined_call_operand.vmem [shape: bf16[2,64,2048], index: 0, kind: input, shape index: {}]
  %s1 = inlined_call_operand.vmem [shape: bf16[2048,13], index: 1, kind: input, shape index: {}]
  %s2 = inlined_call_operand.vmem [shape: bf16[2048,13], index: 2, kind: input, shape index: {}]
  %s3 = inlined_call_operand.vmem [shape: f32[1,13], index: 3, kind: input, shape index: {}]
  %s4 = inlined_call_operand.hbm [shape: f32[2,1,13], index: 4, kind: output, shape index: {}]
  %s5 = sld [smem:[#allocation0]]
  $region49: #{tpu_custom_call.1} parent=0
    _
  %s7 = ssub.s32 1, %s5
  %s8 = scalar_select 0, %s7, %s5
  $region1: #{tpu_custom_call.1} parent=0
    #allocation2 [shape = 'u8[1024]{0}', space=vmem, size = 0x400, scoped, tag = 'output window, operand 0']
    #allocation3 [shape = 's32[2]{0}', space=sflag, size = 0x8, scoped, tag = 'scoped memory for tpu_custom_call.1']
    %9 = vsyncpa [#allocation3], 0
    %s10 = scalar_lea.sflag [#allocation3], 1
    %11 = vsyncpa %s10, 0
    loop: start=0, step=1, limit=4
    $region2: #{tpu_custom_call.1} parent=1 // loop_pre_header
      _
    $region3: #{tpu_custom_call.1} parent=1 // loop_header
      %s13 = sphi 0, %s17
      %p14 = scmp.ge.s32.totalorder %s13, 4
      %s23 = sphi 0, %s25
      %s26 = sphi 0, %s23
      %s27 = sphi 0, %s26
      %s43 = sphi 0, %s27
      %s47 = sphi 0, %s47
      %s49 = sphi 0, %s47
      %s50 = sphi 0, %s49
      %s64 = sphi 0, %s50
      %s68 = sphi 0, %s68
      %s70 = sphi 0, %s68
      %s71 = sphi 0, %s70
      %s85 = sphi 0, %s71
      %s89 = sphi 0, %s89
      %s91 = sphi 0, %s89
      %s92 = sphi 0, %s91
      %s106 = sphi 0, %s92
      %s112 = sphi 0, %s114
      %s115 = sphi 0, %s112
      %s116 = sphi 0, %s115
      %s132 = sphi 0, %s116
    $region4: #{tpu_custom_call.1} parent=1 // loop_header_branch
      %16 = sbr.rel (%p14) target = $region8
    $region5: #{tpu_custom_call.1} parent=1 // loop_body
      %s18 = ssub.s32 %s13, 1
      %s19 = ssub.s32 %s13, 2
      %s20 = sadd.s32 %s13, 1
      %s21 = ssub.s32 %s13, %s20
      %p22 = scmp.eq.s32.totalorder %s21, 0
      %s24 = sadd.s32 %s23, 1
      %s25 = scalar_select %p22, %s23, %s24
      %p28 = pneg %p22
      %p29 = scmp.eq.s32.totalorder %s13, 1
      %p30 = por %p28, %p29
      %p31 = scmp.ne.s32.totalorder %s23, %s26
      %p32 = scmp.eq.s32.totalorder %s13, 0
      %p33 = por %p31, %p32
      %p34 = scmp.ne.s32.totalorder %s23, %s26
      %p35 = scmp.eq.s32.totalorder %s18, 1
      %p36 = por %p34, %p35
      %p37 = scmp.ne.s32.totalorder %s26, %s27
      %p38 = scmp.eq.s32.totalorder %s18, 0
      %p39 = por %p37, %p38
      %p40 = scmp.ne.s32.totalorder %s26, %s27
      %p41 = scmp.eq.s32.totalorder %s19, 1
      %p42 = por %p40, %p41
      %p44 = scmp.ne.s32.totalorder %s27, %s43
      %p45 = scmp.eq.s32.totalorder %s19, 0
      %p46 = por %p44, %p45
      %s48 = sadd.s32 %s47, 1
      %p51 = scmp.eq.s32.totalorder %s13, 1
      %p52 = scmp.ne.s32.totalorder %s47, %s49
      %p53 = scmp.eq.s32.totalorder %s13, 0
      %p54 = por %p52, %p53
      %p55 = scmp.ne.s32.totalorder %s47, %s49
      %p56 = scmp.eq.s32.totalorder %s18, 1
      %p57 = por %p55, %p56
      %p58 = scmp.ne.s32.totalorder %s49, %s50
      %p59 = scmp.eq.s32.totalorder %s18, 0
      %p60 = por %p58, %p59
      %p61 = scmp.ne.s32.totalorder %s49, %s50
      %p62 = scmp.eq.s32.totalorder %s19, 1
      %p63 = por %p61, %p62
      %p65 = scmp.ne.s32.totalorder %s50, %s64
      %p66 = scmp.eq.s32.totalorder %s19, 0
      %p67 = por %p65, %p66
      %s69 = sadd.s32 %s68, 1
      %p72 = scmp.eq.s32.totalorder %s13, 1
      %p73 = scmp.ne.s32.totalorder %s68, %s70
      %p74 = scmp.eq.s32.totalorder %s13, 0
      %p75 = por %p73, %p74
      %p76 = scmp.ne.s32.totalorder %s68, %s70
      %p77 = scmp.eq.s32.totalorder %s18, 1
      %p78 = por %p76, %p77
      %p79 = scmp.ne.s32.totalorder %s70, %s71
      %p80 = scmp.eq.s32.totalorder %s18, 0
      %p81 = por %p79, %p80
      %p82 = scmp.ne.s32.totalorder %s70, %s71
      %p83 = scmp.eq.s32.totalorder %s19, 1
      %p84 = por %p82, %p83
      %p86 = scmp.ne.s32.totalorder %s71, %s85
      %p87 = scmp.eq.s32.totalorder %s19, 0
      %p88 = por %p86, %p87
      %s90 = sadd.s32 %s89, 1
      %p93 = scmp.eq.s32.totalorder %s13, 1
      %p94 = scmp.ne.s32.totalorder %s89, %s91
      %p95 = scmp.eq.s32.totalorder %s13, 0
      %p96 = por %p94, %p95
      %p97 = scmp.ne.s32.totalorder %s89, %s91
      %p98 = scmp.eq.s32.totalorder %s18, 1
      %p99 = por %p97, %p98
      %p100 = scmp.ne.s32.totalorder %s91, %s92
      %p101 = scmp.eq.s32.totalorder %s18, 0
      %p102 = por %p100, %p101
      %p103 = scmp.ne.s32.totalorder %s91, %s92
      %p104 = scmp.eq.s32.totalorder %s19, 1
      %p105 = por %p103, %p104
      %p107 = scmp.ne.s32.totalorder %s92, %s106
      %p108 = scmp.eq.s32.totalorder %s19, 0
      %p109 = por %p107, %p108
      %s110 = ssub.s32 %s13, %s20
      %p111 = scmp.eq.s32.totalorder %s110, 0
      %s113 = sadd.s32 %s112, 1
      %s114 = scalar_select %p111, %s112, %s113
      %p117 = pneg %p111
      %p118 = scmp.eq.s32.totalorder %s13, 1
      %p119 = por %p117, %p118
      %p120 = scmp.ne.s32.totalorder %s112, %s115
      %p121 = scmp.eq.s32.totalorder %s13, 0
      %p122 = por %p120, %p121
      %p123 = scmp.ne.s32.totalorder %s112, %s115
      %p124 = scmp.eq.s32.totalorder %s18, 1
      %p125 = por %p123, %p124
      %p126 = scmp.ne.s32.totalorder %s115, %s116
      %p127 = scmp.eq.s32.totalorder %s18, 0
      %p128 = por %p126, %p127
      %p129 = scmp.ne.s32.totalorder %s115, %s116
      %p130 = scmp.eq.s32.totalorder %s19, 1
      %p131 = por %p129, %p130
      %p133 = scmp.ne.s32.totalorder %s116, %s132
      %p134 = scmp.eq.s32.totalorder %s19, 0
      %p135 = por %p133, %p134
      %p136 = scmp.le.s32.totalorder 1, %s13
      %p137 = scmp.lt.s32.totalorder %s13, 3
      %p138 = pnand %p136, %p137
      %p139 = pneg %p138
      // Predicated region
      $region9: #{tpu_custom_call.1} parent=5 // pred_check
        _
      $region10: #{tpu_custom_call.1} parent=5 // pred_check_branch
        %141 = sbr.rel (%p138) target = $region12
      $region11: #{tpu_custom_call.1} parent=5 // pred_region
        %s142 = ssub.s32 %s13, 1
        // Predicated region
        $region13: #{tpu_custom_call.1} parent=11 // pred_check
          %p143 = pneg %p60
        $region14: #{tpu_custom_call.1} parent=11 // pred_check_branch
          %145 = sbr.rel (%p143) target = $region16
        $region15: #{tpu_custom_call.1} parent=11 // pred_region
          _
        $region16: #{tpu_custom_call.1} parent=11 // pred_fallthru
          _
        // Predicated region
        $region17: #{tpu_custom_call.1} parent=11 // pred_check
          %p146 = pneg %p81
        $region18: #{tpu_custom_call.1} parent=11 // pred_check_branch
          %148 = sbr.rel (%p146) target = $region20
        $region19: #{tpu_custom_call.1} parent=11 // pred_region
          _
        $region20: #{tpu_custom_call.1} parent=11 // pred_fallthru
          _
        // Predicated region
        $region21: #{tpu_custom_call.1} parent=11 // pred_check
          %p149 = pneg %p102
        $region22: #{tpu_custom_call.1} parent=11 // pred_check_branch
          %151 = sbr.rel (%p149) target = $region24
        $region23: #{tpu_custom_call.1} parent=11 // pred_region
          _
        $region24: #{tpu_custom_call.1} parent=11 // pred_fallthru
          _
      $region12: #{tpu_custom_call.1} parent=5 // pred_fallthru
        _
      %p152 = scmp.lt.s32.totalorder %s13, 2
      // Predicated region
      $region25: #{tpu_custom_call.1} parent=5 // pred_check
        %p153 = pneg %p152
      $region26: #{tpu_custom_call.1} parent=5 // pred_check_branch
        %155 = sbr.rel (%p153) target = $region28
      $region27: #{tpu_custom_call.1} parent=5 // pred_region
        // Predicated region
        $region29: #{tpu_custom_call.1} parent=27 // pred_check
          %p156 = pneg %p33
        $region30: #{tpu_custom_call.1} parent=27 // pred_check_branch
          %158 = sbr.rel (%p156) target = $region32
        $region31: #{tpu_custom_call.1} parent=27 // pred_region
          %p159 = scmp.lt.s32.totalorder %s13, 1
          %s160 = scalar_select %p159, %s13, 1
          %s161 = smul.addr %s160, 128
          %s162 = smul.addr %s161, 4
          %s163 = scalar_lea.vmem %s0, %s162
        $region32: #{tpu_custom_call.1} parent=27 // pred_fallthru
          _
      $region28: #{tpu_custom_call.1} parent=5 // pred_fallthru
        _
      %p164 = scmp.le.s32.totalorder 1, %s13
      %p165 = scmp.lt.s32.totalorder %s13, 3
      %p166 = pnand %p164, %p165
      %p167 = pneg %p166
      // Predicated region
      $region33: #{tpu_custom_call.1} parent=5 // pred_check
        _
      $region34: #{tpu_custom_call.1} parent=5 // pred_check_branch
        %169 = sbr.rel (%p166) target = $region36
      $region35: #{tpu_custom_call.1} parent=5 // pred_region
        %s170 = ssub.s32 %s13, 1
        %p171 = scmp.lt.s32.totalorder %s18, 1
        %s172 = scalar_select %p171, %s18, 1
        %s173 = smul.addr %s172, 128
        %s174 = smul.addr %s173, 4
        %s175 = scalar_lea.vmem %s0, %s174
        %p176 = pneg %p39
        %p177 = pneg %p36
        %p178 = pneg %p60
        %p179 = pneg %p57
        %p180 = pneg %p81
        %p181 = pneg %p78
        %p182 = pneg %p102
        %p183 = pneg %p99
        %p184 = pneg %p128
        %p185 = pneg %p125
        %s186 = sand.u32 %s115, 1
        %s187 = scalar_lea.sflag [#allocation3], %s186
        %s188 = sand.u32 %s115, 1
        %s189 = scalar_lea.vmem [#allocation2], %s188
        %p190 = scmp.lt.s32.totalorder %s18, 1
        %s191 = scalar_select %p190, %s18, 1
        %s192 = smul.addr %s191, 128
        %s193 = smul.addr %s192, 4
        %s194 = scalar_lea.vmem %s0, %s193
        %v196 = vld [vmem:[%s194] sm:$0xff]
        %v197 = vld [vmem:[%s194 + $0x8] sm:$0xff]
        %v198 = vld [vmem:[%s194 + $0x10] sm:$0xff]
        %v199 = vld [vmem:[%s194 + $0x18] sm:$0xff]
        %v200 = vld [vmem:[%s194 + $0x20] sm:$0xff]
        %v201 = vld [vmem:[%s194 + $0x28] sm:$0xff]
        %v202 = vld [vmem:[%s194 + $0x30] sm:$0xff]
        %v203 = vld [vmem:[%s194 + $0x38] sm:$0xff]
        %v204 = vld [vmem:[%s194 + $0x40] sm:$0xff]
        %v205 = vld [vmem:[%s194 + $0x48] sm:$0xff]
        %v206 = vld [vmem:[%s194 + $0x50] sm:$0xff]
        %v207 = vld [vmem:[%s194 + $0x58] sm:$0xff]
        %v208 = vld [vmem:[%s194 + $0x60] sm:$0xff]
        %v209 = vld [vmem:[%s194 + $0x68] sm:$0xff]
        %v210 = vld [vmem:[%s194 + $0x70] sm:$0xff]
        %v211 = vld [vmem:[%s194 + $0x78] sm:$0xff]
        %v212 = vld [vmem:[%s194 + $0x80] sm:$0xff]
        %v213 = vld [vmem:[%s194 + $0x88] sm:$0xff]
        %v214 = vld [vmem:[%s194 + $0x90] sm:$0xff]
        %v215 = vld [vmem:[%s194 + $0x98] sm:$0xff]
        %v216 = vld [vmem:[%s194 + $0xa0] sm:$0xff]
        %v217 = vld [vmem:[%s194 + $0xa8] sm:$0xff]
        %v218 = vld [vmem:[%s194 + $0xb0] sm:$0xff]
        %v219 = vld [vmem:[%s194 + $0xb8] sm:$0xff]
        %v220 = vld [vmem:[%s194 + $0xc0] sm:$0xff]
        %v221 = vld [vmem:[%s194 + $0xc8] sm:$0xff]
        %v222 = vld [vmem:[%s194 + $0xd0] sm:$0xff]
        %v223 = vld [vmem:[%s194 + $0xd8] sm:$0xff]
        %v224 = vld [vmem:[%s194 + $0xe0] sm:$0xff]
        %v225 = vld [vmem:[%s194 + $0xe8] sm:$0xff]
        %v226 = vld [vmem:[%s194 + $0xf0] sm:$0xff]
        %v227 = vld [vmem:[%s194 + $0xf8] sm:$0xff]
        %v228 = vld [vmem:[%s194 + $0x100] sm:$0xff]
        %v229 = vld [vmem:[%s194 + $0x108] sm:$0xff]
        %v230 = vld [vmem:[%s194 + $0x110] sm:$0xff]
        %v231 = vld [vmem:[%s194 + $0x118] sm:$0xff]
        %v232 = vld [vmem:[%s194 + $0x120] sm:$0xff]
        %v233 = vld [vmem:[%s194 + $0x128] sm:$0xff]
        %v234 = vld [vmem:[%s194 + $0x130] sm:$0xff]
        %v235 = vld [vmem:[%s194 + $0x138] sm:$0xff]
        %v236 = vld [vmem:[%s194 + $0x140] sm:$0xff]
        %v237 = vld [vmem:[%s194 + $0x148] sm:$0xff]
        %v238 = vld [vmem:[%s194 + $0x150] sm:$0xff]
        %v239 = vld [vmem:[%s194 + $0x158] sm:$0xff]
        %v240 = vld [vmem:[%s194 + $0x160] sm:$0xff]
        %v241 = vld [vmem:[%s194 + $0x168] sm:$0xff]
        %v242 = vld [vmem:[%s194 + $0x170] sm:$0xff]
        %v243 = vld [vmem:[%s194 + $0x178] sm:$0xff]
        %v244 = vld [vmem:[%s194 + $0x180] sm:$0xff]
        %v245 = vld [vmem:[%s194 + $0x188] sm:$0xff]
        %v246 = vld [vmem:[%s194 + $0x190] sm:$0xff]
        %v247 = vld [vmem:[%s194 + $0x198] sm:$0xff]
        %v248 = vld [vmem:[%s194 + $0x1a0] sm:$0xff]
        %v249 = vld [vmem:[%s194 + $0x1a8] sm:$0xff]
        %v250 = vld [vmem:[%s194 + $0x1b0] sm:$0xff]
        %v251 = vld [vmem:[%s194 + $0x1b8] sm:$0xff]
        %v252 = vld [vmem:[%s194 + $0x1c0] sm:$0xff]
        %v253 = vld [vmem:[%s194 + $0x1c8] sm:$0xff]
        %v254 = vld [vmem:[%s194 + $0x1d0] sm:$0xff]
        %v255 = vld [vmem:[%s194 + $0x1d8] sm:$0xff]
        %v256 = vld [vmem:[%s194 + $0x1e0] sm:$0xff]
        %v257 = vld [vmem:[%s194 + $0x1e8] sm:$0xff]
        %v258 = vld [vmem:[%s194 + $0x1f0] sm:$0xff]
        %v259 = vld [vmem:[%s194 + $0x1f8] sm:$0xff]
        %v260 = vld [vmem:[%s1] sm:$0xf]
        %v261 = vld [vmem:[%s1 + $0x4] sm:$0xf]
        %v262 = vld [vmem:[%s1 + $0x8] sm:$0xf]
        %v263 = vld [vmem:[%s1 + $0xc] sm:$0xf]
        %v264 = vld [vmem:[%s1 + $0x10] sm:$0xf]
        %v265 = vld [vmem:[%s1 + $0x14] sm:$0xf]
        %v266 = vld [vmem:[%s1 + $0x18] sm:$0xf]
        %v267 = vld [vmem:[%s1 + $0x1c] sm:$0xf]
        %v268 = vld [vmem:[%s1 + $0x20] sm:$0xf]
        %v269 = vld [vmem:[%s1 + $0x24] sm:$0xf]
        %v270 = vld [vmem:[%s1 + $0x28] sm:$0xf]
        %v271 = vld [vmem:[%s1 + $0x2c] sm:$0xf]
        %v272 = vld [vmem:[%s1 + $0x30] sm:$0xf]
        %v273 = vld [vmem:[%s1 + $0x34] sm:$0xf]
        %v274 = vld [vmem:[%s1 + $0x38] sm:$0xf]
        %v275 = vld [vmem:[%s1 + $0x3c] sm:$0xf]
        %v276 = vld [vmem:[%s1 + $0x40] sm:$0xf]
        %v277 = vld [vmem:[%s1 + $0x44] sm:$0xf]
        %v278 = vld [vmem:[%s1 + $0x48] sm:$0xf]
        %v279 = vld [vmem:[%s1 + $0x4c] sm:$0xf]
        %v280 = vld [vmem:[%s1 + $0x50] sm:$0xf]
        %v281 = vld [vmem:[%s1 + $0x54] sm:$0xf]
        %v282 = vld [vmem:[%s1 + $0x58] sm:$0xf]
        %v283 = vld [vmem:[%s1 + $0x5c] sm:$0xf]
        %v284 = vld [vmem:[%s1 + $0x60] sm:$0xf]
        %v285 = vld [vmem:[%s1 + $0x64] sm:$0xf]
        %v286 = vld [vmem:[%s1 + $0x68] sm:$0xf]
        %v287 = vld [vmem:[%s1 + $0x6c] sm:$0xf]
        %v288 = vld [vmem:[%s1 + $0x70] sm:$0xf]
        %v289 = vld [vmem:[%s1 + $0x74] sm:$0xf]
        %v290 = vld [vmem:[%s1 + $0x78] sm:$0xf]
        %v291 = vld [vmem:[%s1 + $0x7c] sm:$0xf]
        %v292 = vld [vmem:[%s1 + $0x80] sm:$0xf]
        %v293 = vld [vmem:[%s1 + $0x84] sm:$0xf]
        %v294 = vld [vmem:[%s1 + $0x88] sm:$0xf]
        %v295 = vld [vmem:[%s1 + $0x8c] sm:$0xf]
        %v296 = vld [vmem:[%s1 + $0x90] sm:$0xf]
        %v297 = vld [vmem:[%s1 + $0x94] sm:$0xf]
        %v298 = vld [vmem:[%s1 + $0x98] sm:$0xf]
        %v299 = vld [vmem:[%s1 + $0x9c] sm:$0xf]
        %v300 = vld [vmem:[%s1 + $0xa0] sm:$0xf]
        %v301 = vld [vmem:[%s1 + $0xa4] sm:$0xf]
        %v302 = vld [vmem:[%s1 + $0xa8] sm:$0xf]
        %v303 = vld [vmem:[%s1 + $0xac] sm:$0xf]
        %v304 = vld [vmem:[%s1 + $0xb0] sm:$0xf]
        %v305 = vld [vmem:[%s1 + $0xb4] sm:$0xf]
        %v306 = vld [vmem:[%s1 + $0xb8] sm:$0xf]
        %v307 = vld [vmem:[%s1 + $0xbc] sm:$0xf]
        %v308 = vld [vmem:[%s1 + $0xc0] sm:$0xf]
        %v309 = vld [vmem:[%s1 + $0xc4] sm:$0xf]
        %v310 = vld [vmem:[%s1 + $0xc8] sm:$0xf]
        %v311 = vld [vmem:[%s1 + $0xcc] sm:$0xf]
        %v312 = vld [vmem:[%s1 + $0xd0] sm:$0xf]
        %v313 = vld [vmem:[%s1 + $0xd4] sm:$0xf]
        %v314 = vld [vmem:[%s1 + $0xd8] sm:$0xf]
        %v315 = vld [vmem:[%s1 + $0xdc] sm:$0xf]
        %v316 = vld [vmem:[%s1 + $0xe0] sm:$0xf]
        %v317 = vld [vmem:[%s1 + $0xe4] sm:$0xf]
        %v318 = vld [vmem:[%s1 + $0xe8] sm:$0xf]
        %v319 = vld [vmem:[%s1 + $0xec] sm:$0xf]
        %v320 = vld [vmem:[%s1 + $0xf0] sm:$0xf]
        %v321 = vld [vmem:[%s1 + $0xf4] sm:$0xf]
        %v322 = vld [vmem:[%s1 + $0xf8] sm:$0xf]
        %v323 = vld [vmem:[%s1 + $0xfc] sm:$0xf]
        %v324 = vld [vmem:[%s1 + $0x100] sm:$0xf]
        %v325 = vld [vmem:[%s1 + $0x104] sm:$0xf]
        %v326 = vld [vmem:[%s1 + $0x108] sm:$0xf]
        %v327 = vld [vmem:[%s1 + $0x10c] sm:$0xf]
        %v328 = vld [vmem:[%s1 + $0x110] sm:$0xf]
        %v329 = vld [vmem:[%s1 + $0x114] sm:$0xf]
        %v330 = vld [vmem:[%s1 + $0x118] sm:$0xf]
        %v331 = vld [vmem:[%s1 + $0x11c] sm:$0xf]
        %v332 = vld [vmem:[%s1 + $0x120] sm:$0xf]
        %v333 = vld [vmem:[%s1 + $0x124] sm:$0xf]
        %v334 = vld [vmem:[%s1 + $0x128] sm:$0xf]
        %v335 = vld [vmem:[%s1 + $0x12c] sm:$0xf]
        %v336 = vld [vmem:[%s1 + $0x130] sm:$0xf]
        %v337 = vld [vmem:[%s1 + $0x134] sm:$0xf]
        %v338 = vld [vmem:[%s1 + $0x138] sm:$0xf]
        %v339 = vld [vmem:[%s1 + $0x13c] sm:$0xf]
        %v340 = vld [vmem:[%s1 + $0x140] sm:$0xf]
        %v341 = vld [vmem:[%s1 + $0x144] sm:$0xf]
        %v342 = vld [vmem:[%s1 + $0x148] sm:$0xf]
        %v343 = vld [vmem:[%s1 + $0x14c] sm:$0xf]
        %v344 = vld [vmem:[%s1 + $0x150] sm:$0xf]
        %v345 = vld [vmem:[%s1 + $0x154] sm:$0xf]
        %v346 = vld [vmem:[%s1 + $0x158] sm:$0xf]
        %v347 = vld [vmem:[%s1 + $0x15c] sm:$0xf]
        %v348 = vld [vmem:[%s1 + $0x160] sm:$0xf]
        %v349 = vld [vmem:[%s1 + $0x164] sm:$0xf]
        %v350 = vld [vmem:[%s1 + $0x168] sm:$0xf]
        %v351 = vld [vmem:[%s1 + $0x16c] sm:$0xf]
        %v352 = vld [vmem:[%s1 + $0x170] sm:$0xf]
        %v353 = vld [vmem:[%s1 + $0x174] sm:$0xf]
        %v354 = vld [vmem:[%s1 + $0x178] sm:$0xf]
        %v355 = vld [vmem:[%s1 + $0x17c] sm:$0xf]
        %v356 = vld [vmem:[%s1 + $0x180] sm:$0xf]
        %v357 = vld [vmem:[%s1 + $0x184] sm:$0xf]
        %v358 = vld [vmem:[%s1 + $0x188] sm:$0xf]
        %v359 = vld [vmem:[%s1 + $0x18c] sm:$0xf]
        %v360 = vld [vmem:[%s1 + $0x190] sm:$0xf]
        %v361 = vld [vmem:[%s1 + $0x194] sm:$0xf]
        %v362 = vld [vmem:[%s1 + $0x198] sm:$0xf]
        %v363 = vld [vmem:[%s1 + $0x19c] sm:$0xf]
        %v364 = vld [vmem:[%s1 + $0x1a0] sm:$0xf]
        %v365 = vld [vmem:[%s1 + $0x1a4] sm:$0xf]
        %v366 = vld [vmem:[%s1 + $0x1a8] sm:$0xf]
        %v367 = vld [vmem:[%s1 + $0x1ac] sm:$0xf]
        %v368 = vld [vmem:[%s1 + $0x1b0] sm:$0xf]
        %v369 = vld [vmem:[%s1 + $0x1b4] sm:$0xf]
        %v370 = vld [vmem:[%s1 + $0x1b8] sm:$0xf]
        %v371 = vld [vmem:[%s1 + $0x1bc] sm:$0xf]
        %v372 = vld [vmem:[%s1 + $0x1c0] sm:$0xf]
        %v373 = vld [vmem:[%s1 + $0x1c4] sm:$0xf]
        %v374 = vld [vmem:[%s1 + $0x1c8] sm:$0xf]
        %v375 = vld [vmem:[%s1 + $0x1cc] sm:$0xf]
        %v376 = vld [vmem:[%s1 + $0x1d0] sm:$0xf]
        %v377 = vld [vmem:[%s1 + $0x1d4] sm:$0xf]
        %v378 = vld [vmem:[%s1 + $0x1d8] sm:$0xf]
        %v379 = vld [vmem:[%s1 + $0x1dc] sm:$0xf]
        %v380 = vld [vmem:[%s1 + $0x1e0] sm:$0xf]
        %v381 = vld [vmem:[%s1 + $0x1e4] sm:$0xf]
        %v382 = vld [vmem:[%s1 + $0x1e8] sm:$0xf]
        %v383 = vld [vmem:[%s1 + $0x1ec] sm:$0xf]
        %v384 = vld [vmem:[%s1 + $0x1f0] sm:$0xf]
        %v385 = vld [vmem:[%s1 + $0x1f4] sm:$0xf]
        %v386 = vld [vmem:[%s1 + $0x1f8] sm:$0xf]
        %v387 = vld [vmem:[%s1 + $0x1fc] sm:$0xf]
        %v388 = vld [vmem:[%s1 + $0x200] sm:$0xf]
        %v389 = vld [vmem:[%s1 + $0x204] sm:$0xf]
        %v390 = vld [vmem:[%s1 + $0x208] sm:$0xf]
        %v391 = vld [vmem:[%s1 + $0x20c] sm:$0xf]
        %v392 = vld [vmem:[%s1 + $0x210] sm:$0xf]
        %v393 = vld [vmem:[%s1 + $0x214] sm:$0xf]
        %v394 = vld [vmem:[%s1 + $0x218] sm:$0xf]
        %v395 = vld [vmem:[%s1 + $0x21c] sm:$0xf]
        %v396 = vld [vmem:[%s1 + $0x220] sm:$0xf]
        %v397 = vld [vmem:[%s1 + $0x224] sm:$0xf]
        %v398 = vld [vmem:[%s1 + $0x228] sm:$0xf]
        %v399 = vld [vmem:[%s1 + $0x22c] sm:$0xf]
        %v400 = vld [vmem:[%s1 + $0x230] sm:$0xf]
        %v401 = vld [vmem:[%s1 + $0x234] sm:$0xf]
        %v402 = vld [vmem:[%s1 + $0x238] sm:$0xf]
        %v403 = vld [vmem:[%s1 + $0x23c] sm:$0xf]
        %v404 = vld [vmem:[%s1 + $0x240] sm:$0xf]
        %v405 = vld [vmem:[%s1 + $0x244] sm:$0xf]
        %v406 = vld [vmem:[%s1 + $0x248] sm:$0xf]
        %v407 = vld [vmem:[%s1 + $0x24c] sm:$0xf]
        %v408 = vld [vmem:[%s1 + $0x250] sm:$0xf]
        %v409 = vld [vmem:[%s1 + $0x254] sm:$0xf]
        %v410 = vld [vmem:[%s1 + $0x258] sm:$0xf]
        %v411 = vld [vmem:[%s1 + $0x25c] sm:$0xf]
        %v412 = vld [vmem:[%s1 + $0x260] sm:$0xf]
        %v413 = vld [vmem:[%s1 + $0x264] sm:$0xf]
        %v414 = vld [vmem:[%s1 + $0x268] sm:$0xf]
        %v415 = vld [vmem:[%s1 + $0x26c] sm:$0xf]
        %v416 = vld [vmem:[%s1 + $0x270] sm:$0xf]
        %v417 = vld [vmem:[%s1 + $0x274] sm:$0xf]
        %v418 = vld [vmem:[%s1 + $0x278] sm:$0xf]
        %v419 = vld [vmem:[%s1 + $0x27c] sm:$0xf]
        %v420 = vld [vmem:[%s1 + $0x280] sm:$0xf]
        %v421 = vld [vmem:[%s1 + $0x284] sm:$0xf]
        %v422 = vld [vmem:[%s1 + $0x288] sm:$0xf]
        %v423 = vld [vmem:[%s1 + $0x28c] sm:$0xf]
        %v424 = vld [vmem:[%s1 + $0x290] sm:$0xf]
        %v425 = vld [vmem:[%s1 + $0x294] sm:$0xf]
        %v426 = vld [vmem:[%s1 + $0x298] sm:$0xf]
        %v427 = vld [vmem:[%s1 + $0x29c] sm:$0xf]
        %v428 = vld [vmem:[%s1 + $0x2a0] sm:$0xf]
        %v429 = vld [vmem:[%s1 + $0x2a4] sm:$0xf]
        %v430 = vld [vmem:[%s1 + $0x2a8] sm:$0xf]
        %v431 = vld [vmem:[%s1 + $0x2ac] sm:$0xf]
        %v432 = vld [vmem:[%s1 + $0x2b0] sm:$0xf]
        %v433 = vld [vmem:[%s1 + $0x2b4] sm:$0xf]
        %v434 = vld [vmem:[%s1 + $0x2b8] sm:$0xf]
        %v435 = vld [vmem:[%s1 + $0x2bc] sm:$0xf]
        %v436 = vld [vmem:[%s1 + $0x2c0] sm:$0xf]
        %v437 = vld [vmem:[%s1 + $0x2c4] sm:$0xf]
        %v438 = vld [vmem:[%s1 + $0x2c8] sm:$0xf]
        %v439 = vld [vmem:[%s1 + $0x2cc] sm:$0xf]
        %v440 = vld [vmem:[%s1 + $0x2d0] sm:$0xf]
        %v441 = vld [vmem:[%s1 + $0x2d4] sm:$0xf]
        %v442 = vld [vmem:[%s1 + $0x2d8] sm:$0xf]
        %v443 = vld [vmem:[%s1 + $0x2dc] sm:$0xf]
        %v444 = vld [vmem:[%s1 + $0x2e0] sm:$0xf]
        %v445 = vld [vmem:[%s1 + $0x2e4] sm:$0xf]
        %v446 = vld [vmem:[%s1 + $0x2e8] sm:$0xf]
        %v447 = vld [vmem:[%s1 + $0x2ec] sm:$0xf]
        %v448 = vld [vmem:[%s1 + $0x2f0] sm:$0xf]
        %v449 = vld [vmem:[%s1 + $0x2f4] sm:$0xf]
        %v450 = vld [vmem:[%s1 + $0x2f8] sm:$0xf]
        %v451 = vld [vmem:[%s1 + $0x2fc] sm:$0xf]
        %v452 = vld [vmem:[%s1 + $0x300] sm:$0xf]
        %v453 = vld [vmem:[%s1 + $0x304] sm:$0xf]
        %v454 = vld [vmem:[%s1 + $0x308] sm:$0xf]
        %v455 = vld [vmem:[%s1 + $0x30c] sm:$0xf]
        %v456 = vld [vmem:[%s1 + $0x310] sm:$0xf]
        %v457 = vld [vmem:[%s1 + $0x314] sm:$0xf]
        %v458 = vld [vmem:[%s1 + $0x318] sm:$0xf]
        %v459 = vld [vmem:[%s1 + $0x31c] sm:$0xf]
        %v460 = vld [vmem:[%s1 + $0x320] sm:$0xf]
        %v461 = vld [vmem:[%s1 + $0x324] sm:$0xf]
        %v462 = vld [vmem:[%s1 + $0x328] sm:$0xf]
        %v463 = vld [vmem:[%s1 + $0x32c] sm:$0xf]
        %v464 = vld [vmem:[%s1 + $0x330] sm:$0xf]
        %v465 = vld [vmem:[%s1 + $0x334] sm:$0xf]
        %v466 = vld [vmem:[%s1 + $0x338] sm:$0xf]
        %v467 = vld [vmem:[%s1 + $0x33c] sm:$0xf]
        %v468 = vld [vmem:[%s1 + $0x340] sm:$0xf]
        %v469 = vld [vmem:[%s1 + $0x344] sm:$0xf]
        %v470 = vld [vmem:[%s1 + $0x348] sm:$0xf]
        %v471 = vld [vmem:[%s1 + $0x34c] sm:$0xf]
        %v472 = vld [vmem:[%s1 + $0x350] sm:$0xf]
        %v473 = vld [vmem:[%s1 + $0x354] sm:$0xf]
        %v474 = vld [vmem:[%s1 + $0x358] sm:$0xf]
        %v475 = vld [vmem:[%s1 + $0x35c] sm:$0xf]
        %v476 = vld [vmem:[%s1 + $0x360] sm:$0xf]
        %v477 = vld [vmem:[%s1 + $0x364] sm:$0xf]
        %v478 = vld [vmem:[%s1 + $0x368] sm:$0xf]
        %v479 = vld [vmem:[%s1 + $0x36c] sm:$0xf]
        %v480 = vld [vmem:[%s1 + $0x370] sm:$0xf]
        %v481 = vld [vmem:[%s1 + $0x374] sm:$0xf]
        %v482 = vld [vmem:[%s1 + $0x378] sm:$0xf]
        %v483 = vld [vmem:[%s1 + $0x37c] sm:$0xf]
        %v484 = vld [vmem:[%s1 + $0x380] sm:$0xf]
        %v485 = vld [vmem:[%s1 + $0x384] sm:$0xf]
        %v486 = vld [vmem:[%s1 + $0x388] sm:$0xf]
        %v487 = vld [vmem:[%s1 + $0x38c] sm:$0xf]
        %v488 = vld [vmem:[%s1 + $0x390] sm:$0xf]
        %v489 = vld [vmem:[%s1 + $0x394] sm:$0xf]
        %v490 = vld [vmem:[%s1 + $0x398] sm:$0xf]
        %v491 = vld [vmem:[%s1 + $0x39c] sm:$0xf]
        %v492 = vld [vmem:[%s1 + $0x3a0] sm:$0xf]
        %v493 = vld [vmem:[%s1 + $0x3a4] sm:$0xf]
        %v494 = vld [vmem:[%s1 + $0x3a8] sm:$0xf]
        %v495 = vld [vmem:[%s1 + $0x3ac] sm:$0xf]
        %v496 = vld [vmem:[%s1 + $0x3b0] sm:$0xf]
        %v497 = vld [vmem:[%s1 + $0x3b4] sm:$0xf]
        %v498 = vld [vmem:[%s1 + $0x3b8] sm:$0xf]
        %v499 = vld [vmem:[%s1 + $0x3bc] sm:$0xf]
        %v500 = vld [vmem:[%s1 + $0x3c0] sm:$0xf]
        %v501 = vld [vmem:[%s1 + $0x3c4] sm:$0xf]
        %v502 = vld [vmem:[%s1 + $0x3c8] sm:$0xf]
        %v503 = vld [vmem:[%s1 + $0x3cc] sm:$0xf]
        %v504 = vld [vmem:[%s1 + $0x3d0] sm:$0xf]
        %v505 = vld [vmem:[%s1 + $0x3d4] sm:$0xf]
        %v506 = vld [vmem:[%s1 + $0x3d8] sm:$0xf]
        %v507 = vld [vmem:[%s1 + $0x3dc] sm:$0xf]
        %v508 = vld [vmem:[%s1 + $0x3e0] sm:$0xf]
        %v509 = vld [vmem:[%s1 + $0x3e4] sm:$0xf]
        %v510 = vld [vmem:[%s1 + $0x3e8] sm:$0xf]
        %v511 = vld [vmem:[%s1 + $0x3ec] sm:$0xf]
        %v512 = vld [vmem:[%s1 + $0x3f0] sm:$0xf]
        %v513 = vld [vmem:[%s1 + $0x3f4] sm:$0xf]
        %v514 = vld [vmem:[%s1 + $0x3f8] sm:$0xf]
        %v515 = vld [vmem:[%s1 + $0x3fc] sm:$0xf]
        %v516 = vld [vmem:[%s2] sm:$0xf]
        %v517 = vld [vmem:[%s2 + $0x4] sm:$0xf]
        %v518 = vld [vmem:[%s2 + $0x8] sm:$0xf]
        %v519 = vld [vmem:[%s2 + $0xc] sm:$0xf]
        %v520 = vld [vmem:[%s2 + $0x10] sm:$0xf]
        %v521 = vld [vmem:[%s2 + $0x14] sm:$0xf]
        %v522 = vld [vmem:[%s2 + $0x18] sm:$0xf]
        %v523 = vld [vmem:[%s2 + $0x1c] sm:$0xf]
        %v524 = vld [vmem:[%s2 + $0x20] sm:$0xf]
        %v525 = vld [vmem:[%s2 + $0x24] sm:$0xf]
        %v526 = vld [vmem:[%s2 + $0x28] sm:$0xf]
        %v527 = vld [vmem:[%s2 + $0x2c] sm:$0xf]
        %v528 = vld [vmem:[%s2 + $0x30] sm:$0xf]
        %v529 = vld [vmem:[%s2 + $0x34] sm:$0xf]
        %v530 = vld [vmem:[%s2 + $0x38] sm:$0xf]
        %v531 = vld [vmem:[%s2 + $0x3c] sm:$0xf]
        %v532 = vld [vmem:[%s2 + $0x40] sm:$0xf]
        %v533 = vld [vmem:[%s2 + $0x44] sm:$0xf]
        %v534 = vld [vmem:[%s2 + $0x48] sm:$0xf]
        %v535 = vld [vmem:[%s2 + $0x4c] sm:$0xf]
        %v536 = vld [vmem:[%s2 + $0x50] sm:$0xf]
        %v537 = vld [vmem:[%s2 + $0x54] sm:$0xf]
        %v538 = vld [vmem:[%s2 + $0x58] sm:$0xf]
        %v539 = vld [vmem:[%s2 + $0x5c] sm:$0xf]
        %v540 = vld [vmem:[%s2 + $0x60] sm:$0xf]
        %v541 = vld [vmem:[%s2 + $0x64] sm:$0xf]
        %v542 = vld [vmem:[%s2 + $0x68] sm:$0xf]
        %v543 = vld [vmem:[%s2 + $0x6c] sm:$0xf]
        %v544 = vld [vmem:[%s2 + $0x70] sm:$0xf]
        %v545 = vld [vmem:[%s2 + $0x74] sm:$0xf]
        %v546 = vld [vmem:[%s2 + $0x78] sm:$0xf]
        %v547 = vld [vmem:[%s2 + $0x7c] sm:$0xf]
        %v548 = vld [vmem:[%s2 + $0x80] sm:$0xf]
        %v549 = vld [vmem:[%s2 + $0x84] sm:$0xf]
        %v550 = vld [vmem:[%s2 + $0x88] sm:$0xf]
        %v551 = vld [vmem:[%s2 + $0x8c] sm:$0xf]
        %v552 = vld [vmem:[%s2 + $0x90] sm:$0xf]
        %v553 = vld [vmem:[%s2 + $0x94] sm:$0xf]
        %v554 = vld [vmem:[%s2 + $0x98] sm:$0xf]
        %v555 = vld [vmem:[%s2 + $0x9c] sm:$0xf]
        %v556 = vld [vmem:[%s2 + $0xa0] sm:$0xf]
        %v557 = vld [vmem:[%s2 + $0xa4] sm:$0xf]
        %v558 = vld [vmem:[%s2 + $0xa8] sm:$0xf]
        %v559 = vld [vmem:[%s2 + $0xac] sm:$0xf]
        %v560 = vld [vmem:[%s2 + $0xb0] sm:$0xf]
        %v561 = vld [vmem:[%s2 + $0xb4] sm:$0xf]
        %v562 = vld [vmem:[%s2 + $0xb8] sm:$0xf]
        %v563 = vld [vmem:[%s2 + $0xbc] sm:$0xf]
        %v564 = vld [vmem:[%s2 + $0xc0] sm:$0xf]
        %v565 = vld [vmem:[%s2 + $0xc4] sm:$0xf]
        %v566 = vld [vmem:[%s2 + $0xc8] sm:$0xf]
        %v567 = vld [vmem:[%s2 + $0xcc] sm:$0xf]
        %v568 = vld [vmem:[%s2 + $0xd0] sm:$0xf]
        %v569 = vld [vmem:[%s2 + $0xd4] sm:$0xf]
        %v570 = vld [vmem:[%s2 + $0xd8] sm:$0xf]
        %v571 = vld [vmem:[%s2 + $0xdc] sm:$0xf]
        %v572 = vld [vmem:[%s2 + $0xe0] sm:$0xf]
        %v573 = vld [vmem:[%s2 + $0xe4] sm:$0xf]
        %v574 = vld [vmem:[%s2 + $0xe8] sm:$0xf]
        %v575 = vld [vmem:[%s2 + $0xec] sm:$0xf]
        %v576 = vld [vmem:[%s2 + $0xf0] sm:$0xf]
        %v577 = vld [vmem:[%s2 + $0xf4] sm:$0xf]
        %v578 = vld [vmem:[%s2 + $0xf8] sm:$0xf]
        %v579 = vld [vmem:[%s2 + $0xfc] sm:$0xf]
        %v580 = vld [vmem:[%s2 + $0x100] sm:$0xf]
        %v581 = vld [vmem:[%s2 + $0x104] sm:$0xf]
        %v582 = vld [vmem:[%s2 + $0x108] sm:$0xf]
        %v583 = vld [vmem:[%s2 + $0x10c] sm:$0xf]
        %v584 = vld [vmem:[%s2 + $0x110] sm:$0xf]
        %v585 = vld [vmem:[%s2 + $0x114] sm:$0xf]
        %v586 = vld [vmem:[%s2 + $0x118] sm:$0xf]
        %v587 = vld [vmem:[%s2 + $0x11c] sm:$0xf]
        %v588 = vld [vmem:[%s2 + $0x120] sm:$0xf]
        %v589 = vld [vmem:[%s2 + $0x124] sm:$0xf]
        %v590 = vld [vmem:[%s2 + $0x128] sm:$0xf]
        %v591 = vld [vmem:[%s2 + $0x12c] sm:$0xf]
        %v592 = vld [vmem:[%s2 + $0x130] sm:$0xf]
        %v593 = vld [vmem:[%s2 + $0x134] sm:$0xf]
        %v594 = vld [vmem:[%s2 + $0x138] sm:$0xf]
        %v595 = vld [vmem:[%s2 + $0x13c] sm:$0xf]
        %v596 = vld [vmem:[%s2 + $0x140] sm:$0xf]
        %v597 = vld [vmem:[%s2 + $0x144] sm:$0xf]
        %v598 = vld [vmem:[%s2 + $0x148] sm:$0xf]
        %v599 = vld [vmem:[%s2 + $0x14c] sm:$0xf]
        %v600 = vld [vmem:[%s2 + $0x150] sm:$0xf]
        %v601 = vld [vmem:[%s2 + $0x154] sm:$0xf]
        %v602 = vld [vmem:[%s2 + $0x158] sm:$0xf]
        %v603 = vld [vmem:[%s2 + $0x15c] sm:$0xf]
        %v604 = vld [vmem:[%s2 + $0x160] sm:$0xf]
        %v605 = vld [vmem:[%s2 + $0x164] sm:$0xf]
        %v606 = vld [vmem:[%s2 + $0x168] sm:$0xf]
        %v607 = vld [vmem:[%s2 + $0x16c] sm:$0xf]
        %v608 = vld [vmem:[%s2 + $0x170] sm:$0xf]
        %v609 = vld [vmem:[%s2 + $0x174] sm:$0xf]
        %v610 = vld [vmem:[%s2 + $0x178] sm:$0xf]
        %v611 = vld [vmem:[%s2 + $0x17c] sm:$0xf]
        %v612 = vld [vmem:[%s2 + $0x180] sm:$0xf]
        %v613 = vld [vmem:[%s2 + $0x184] sm:$0xf]
        %v614 = vld [vmem:[%s2 + $0x188] sm:$0xf]
        %v615 = vld [vmem:[%s2 + $0x18c] sm:$0xf]
        %v616 = vld [vmem:[%s2 + $0x190] sm:$0xf]
        %v617 = vld [vmem:[%s2 + $0x194] sm:$0xf]
        %v618 = vld [vmem:[%s2 + $0x198] sm:$0xf]
        %v619 = vld [vmem:[%s2 + $0x19c] sm:$0xf]
        %v620 = vld [vmem:[%s2 + $0x1a0] sm:$0xf]
        %v621 = vld [vmem:[%s2 + $0x1a4] sm:$0xf]
        %v622 = vld [vmem:[%s2 + $0x1a8] sm:$0xf]
        %v623 = vld [vmem:[%s2 + $0x1ac] sm:$0xf]
        %v624 = vld [vmem:[%s2 + $0x1b0] sm:$0xf]
        %v625 = vld [vmem:[%s2 + $0x1b4] sm:$0xf]
        %v626 = vld [vmem:[%s2 + $0x1b8] sm:$0xf]
        %v627 = vld [vmem:[%s2 + $0x1bc] sm:$0xf]
        %v628 = vld [vmem:[%s2 + $0x1c0] sm:$0xf]
        %v629 = vld [vmem:[%s2 + $0x1c4] sm:$0xf]
        %v630 = vld [vmem:[%s2 + $0x1c8] sm:$0xf]
        %v631 = vld [vmem:[%s2 + $0x1cc] sm:$0xf]
        %v632 = vld [vmem:[%s2 + $0x1d0] sm:$0xf]
        %v633 = vld [vmem:[%s2 + $0x1d4] sm:$0xf]
        %v634 = vld [vmem:[%s2 + $0x1d8] sm:$0xf]
        %v635 = vld [vmem:[%s2 + $0x1dc] sm:$0xf]
        %v636 = vld [vmem:[%s2 + $0x1e0] sm:$0xf]
        %v637 = vld [vmem:[%s2 + $0x1e4] sm:$0xf]
        %v638 = vld [vmem:[%s2 + $0x1e8] sm:$0xf]
        %v639 = vld [vmem:[%s2 + $0x1ec] sm:$0xf]
        %v640 = vld [vmem:[%s2 + $0x1f0] sm:$0xf]
        %v641 = vld [vmem:[%s2 + $0x1f4] sm:$0xf]
        %v642 = vld [vmem:[%s2 + $0x1f8] sm:$0xf]
        %v643 = vld [vmem:[%s2 + $0x1fc] sm:$0xf]
        %v644 = vld [vmem:[%s2 + $0x200] sm:$0xf]
        %v645 = vld [vmem:[%s2 + $0x204] sm:$0xf]
        %v646 = vld [vmem:[%s2 + $0x208] sm:$0xf]
        %v647 = vld [vmem:[%s2 + $0x20c] sm:$0xf]
        %v648 = vld [vmem:[%s2 + $0x210] sm:$0xf]
        %v649 = vld [vmem:[%s2 + $0x214] sm:$0xf]
        %v650 = vld [vmem:[%s2 + $0x218] sm:$0xf]
        %v651 = vld [vmem:[%s2 + $0x21c] sm:$0xf]
        %v652 = vld [vmem:[%s2 + $0x220] sm:$0xf]
        %v653 = vld [vmem:[%s2 + $0x224] sm:$0xf]
        %v654 = vld [vmem:[%s2 + $0x228] sm:$0xf]
        %v655 = vld [vmem:[%s2 + $0x22c] sm:$0xf]
        %v656 = vld [vmem:[%s2 + $0x230] sm:$0xf]
        %v657 = vld [vmem:[%s2 + $0x234] sm:$0xf]
        %v658 = vld [vmem:[%s2 + $0x238] sm:$0xf]
        %v659 = vld [vmem:[%s2 + $0x23c] sm:$0xf]
        %v660 = vld [vmem:[%s2 + $0x240] sm:$0xf]
        %v661 = vld [vmem:[%s2 + $0x244] sm:$0xf]
        %v662 = vld [vmem:[%s2 + $0x248] sm:$0xf]
        %v663 = vld [vmem:[%s2 + $0x24c] sm:$0xf]
        %v664 = vld [vmem:[%s2 + $0x250] sm:$0xf]
        %v665 = vld [vmem:[%s2 + $0x254] sm:$0xf]
        %v666 = vld [vmem:[%s2 + $0x258] sm:$0xf]
        %v667 = vld [vmem:[%s2 + $0x25c] sm:$0xf]
        %v668 = vld [vmem:[%s2 + $0x260] sm:$0xf]
        %v669 = vld [vmem:[%s2 + $0x264] sm:$0xf]
        %v670 = vld [vmem:[%s2 + $0x268] sm:$0xf]
        %v671 = vld [vmem:[%s2 + $0x26c] sm:$0xf]
        %v672 = vld [vmem:[%s2 + $0x270] sm:$0xf]
        %v673 = vld [vmem:[%s2 + $0x274] sm:$0xf]
        %v674 = vld [vmem:[%s2 + $0x278] sm:$0xf]
        %v675 = vld [vmem:[%s2 + $0x27c] sm:$0xf]
        %v676 = vld [vmem:[%s2 + $0x280] sm:$0xf]
        %v677 = vld [vmem:[%s2 + $0x284] sm:$0xf]
        %v678 = vld [vmem:[%s2 + $0x288] sm:$0xf]
        %v679 = vld [vmem:[%s2 + $0x28c] sm:$0xf]
        %v680 = vld [vmem:[%s2 + $0x290] sm:$0xf]
        %v681 = vld [vmem:[%s2 + $0x294] sm:$0xf]
        %v682 = vld [vmem:[%s2 + $0x298] sm:$0xf]
        %v683 = vld [vmem:[%s2 + $0x29c] sm:$0xf]
        %v684 = vld [vmem:[%s2 + $0x2a0] sm:$0xf]
        %v685 = vld [vmem:[%s2 + $0x2a4] sm:$0xf]
        %v686 = vld [vmem:[%s2 + $0x2a8] sm:$0xf]
        %v687 = vld [vmem:[%s2 + $0x2ac] sm:$0xf]
        %v688 = vld [vmem:[%s2 + $0x2b0] sm:$0xf]
        %v689 = vld [vmem:[%s2 + $0x2b4] sm:$0xf]
        %v690 = vld [vmem:[%s2 + $0x2b8] sm:$0xf]
        %v691 = vld [vmem:[%s2 + $0x2bc] sm:$0xf]
        %v692 = vld [vmem:[%s2 + $0x2c0] sm:$0xf]
        %v693 = vld [vmem:[%s2 + $0x2c4] sm:$0xf]
        %v694 = vld [vmem:[%s2 + $0x2c8] sm:$0xf]
        %v695 = vld [vmem:[%s2 + $0x2cc] sm:$0xf]
        %v696 = vld [vmem:[%s2 + $0x2d0] sm:$0xf]
        %v697 = vld [vmem:[%s2 + $0x2d4] sm:$0xf]
        %v698 = vld [vmem:[%s2 + $0x2d8] sm:$0xf]
        %v699 = vld [vmem:[%s2 + $0x2dc] sm:$0xf]
        %v700 = vld [vmem:[%s2 + $0x2e0] sm:$0xf]
        %v701 = vld [vmem:[%s2 + $0x2e4] sm:$0xf]
        %v702 = vld [vmem:[%s2 + $0x2e8] sm:$0xf]
        %v703 = vld [vmem:[%s2 + $0x2ec] sm:$0xf]
        %v704 = vld [vmem:[%s2 + $0x2f0] sm:$0xf]
        %v705 = vld [vmem:[%s2 + $0x2f4] sm:$0xf]
        %v706 = vld [vmem:[%s2 + $0x2f8] sm:$0xf]
        %v707 = vld [vmem:[%s2 + $0x2fc] sm:$0xf]
        %v708 = vld [vmem:[%s2 + $0x300] sm:$0xf]
        %v709 = vld [vmem:[%s2 + $0x304] sm:$0xf]
        %v710 = vld [vmem:[%s2 + $0x308] sm:$0xf]
        %v711 = vld [vmem:[%s2 + $0x30c] sm:$0xf]
        %v712 = vld [vmem:[%s2 + $0x310] sm:$0xf]
        %v713 = vld [vmem:[%s2 + $0x314] sm:$0xf]
        %v714 = vld [vmem:[%s2 + $0x318] sm:$0xf]
        %v715 = vld [vmem:[%s2 + $0x31c] sm:$0xf]
        %v716 = vld [vmem:[%s2 + $0x320] sm:$0xf]
        %v717 = vld [vmem:[%s2 + $0x324] sm:$0xf]
        %v718 = vld [vmem:[%s2 + $0x328] sm:$0xf]
        %v719 = vld [vmem:[%s2 + $0x32c] sm:$0xf]
        %v720 = vld [vmem:[%s2 + $0x330] sm:$0xf]
        %v721 = vld [vmem:[%s2 + $0x334] sm:$0xf]
        %v722 = vld [vmem:[%s2 + $0x338] sm:$0xf]
        %v723 = vld [vmem:[%s2 + $0x33c] sm:$0xf]
        %v724 = vld [vmem:[%s2 + $0x340] sm:$0xf]
        %v725 = vld [vmem:[%s2 + $0x344] sm:$0xf]
        %v726 = vld [vmem:[%s2 + $0x348] sm:$0xf]
        %v727 = vld [vmem:[%s2 + $0x34c] sm:$0xf]
        %v728 = vld [vmem:[%s2 + $0x350] sm:$0xf]
        %v729 = vld [vmem:[%s2 + $0x354] sm:$0xf]
        %v730 = vld [vmem:[%s2 + $0x358] sm:$0xf]
        %v731 = vld [vmem:[%s2 + $0x35c] sm:$0xf]
        %v732 = vld [vmem:[%s2 + $0x360] sm:$0xf]
        %v733 = vld [vmem:[%s2 + $0x364] sm:$0xf]
        %v734 = vld [vmem:[%s2 + $0x368] sm:$0xf]
        %v735 = vld [vmem:[%s2 + $0x36c] sm:$0xf]
        %v736 = vld [vmem:[%s2 + $0x370] sm:$0xf]
        %v737 = vld [vmem:[%s2 + $0x374] sm:$0xf]
        %v738 = vld [vmem:[%s2 + $0x378] sm:$0xf]
        %v739 = vld [vmem:[%s2 + $0x37c] sm:$0xf]
        %v740 = vld [vmem:[%s2 + $0x380] sm:$0xf]
        %v741 = vld [vmem:[%s2 + $0x384] sm:$0xf]
        %v742 = vld [vmem:[%s2 + $0x388] sm:$0xf]
        %v743 = vld [vmem:[%s2 + $0x38c] sm:$0xf]
        %v744 = vld [vmem:[%s2 + $0x390] sm:$0xf]
        %v745 = vld [vmem:[%s2 + $0x394] sm:$0xf]
        %v746 = vld [vmem:[%s2 + $0x398] sm:$0xf]
        %v747 = vld [vmem:[%s2 + $0x39c] sm:$0xf]
        %v748 = vld [vmem:[%s2 + $0x3a0] sm:$0xf]
        %v749 = vld [vmem:[%s2 + $0x3a4] sm:$0xf]
        %v750 = vld [vmem:[%s2 + $0x3a8] sm:$0xf]
        %v751 = vld [vmem:[%s2 + $0x3ac] sm:$0xf]
        %v752 = vld [vmem:[%s2 + $0x3b0] sm:$0xf]
        %v753 = vld [vmem:[%s2 + $0x3b4] sm:$0xf]
        %v754 = vld [vmem:[%s2 + $0x3b8] sm:$0xf]
        %v755 = vld [vmem:[%s2 + $0x3bc] sm:$0xf]
        %v756 = vld [vmem:[%s2 + $0x3c0] sm:$0xf]
        %v757 = vld [vmem:[%s2 + $0x3c4] sm:$0xf]
        %v758 = vld [vmem:[%s2 + $0x3c8] sm:$0xf]
        %v759 = vld [vmem:[%s2 + $0x3cc] sm:$0xf]
        %v760 = vld [vmem:[%s2 + $0x3d0] sm:$0xf]
        %v761 = vld [vmem:[%s2 + $0x3d4] sm:$0xf]
        %v762 = vld [vmem:[%s2 + $0x3d8] sm:$0xf]
        %v763 = vld [vmem:[%s2 + $0x3dc] sm:$0xf]
        %v764 = vld [vmem:[%s2 + $0x3e0] sm:$0xf]
        %v765 = vld [vmem:[%s2 + $0x3e4] sm:$0xf]
        %v766 = vld [vmem:[%s2 + $0x3e8] sm:$0xf]
        %v767 = vld [vmem:[%s2 + $0x3ec] sm:$0xf]
        %v768 = vld [vmem:[%s2 + $0x3f0] sm:$0xf]
        %v769 = vld [vmem:[%s2 + $0x3f4] sm:$0xf]
        %v770 = vld [vmem:[%s2 + $0x3f8] sm:$0xf]
        %v771 = vld [vmem:[%s2 + $0x3fc] sm:$0xf]
        %v836 = vunpack.c.l.b16 %v196
        %v837 = vunpack.c.h.b16 %v196
        %v838 = vunpack.c.l.b16 %v197
        %v839 = vunpack.c.h.b16 %v197
        %v840 = vunpack.c.l.b16 %v198
        %v841 = vunpack.c.h.b16 %v198
        %v842 = vunpack.c.l.b16 %v199
        %v843 = vunpack.c.h.b16 %v199
        %v844 = vunpack.c.l.b16 %v200
        %v845 = vunpack.c.h.b16 %v200
        %v846 = vunpack.c.l.b16 %v201
        %v847 = vunpack.c.h.b16 %v201
        %v848 = vunpack.c.l.b16 %v202
        %v849 = vunpack.c.h.b16 %v202
        %v850 = vunpack.c.l.b16 %v203
        %v851 = vunpack.c.h.b16 %v203
        %v852 = vunpack.c.l.b16 %v204
        %v853 = vunpack.c.h.b16 %v204
        %v854 = vunpack.c.l.b16 %v205
        %v855 = vunpack.c.h.b16 %v205
        %v856 = vunpack.c.l.b16 %v206
        %v857 = vunpack.c.h.b16 %v206
        %v858 = vunpack.c.l.b16 %v207
        %v859 = vunpack.c.h.b16 %v207
        %v860 = vunpack.c.l.b16 %v208
        %v861 = vunpack.c.h.b16 %v208
        %v862 = vunpack.c.l.b16 %v209
        %v863 = vunpack.c.h.b16 %v209
        %v864 = vunpack.c.l.b16 %v210
        %v865 = vunpack.c.h.b16 %v210
        %v866 = vunpack.c.l.b16 %v211
        %v867 = vunpack.c.h.b16 %v211
        %v868 = vunpack.c.l.b16 %v212
        %v869 = vunpack.c.h.b16 %v212
        %v870 = vunpack.c.l.b16 %v213
        %v871 = vunpack.c.h.b16 %v213
        %v872 = vunpack.c.l.b16 %v214
        %v873 = vunpack.c.h.b16 %v214
        %v874 = vunpack.c.l.b16 %v215
        %v875 = vunpack.c.h.b16 %v215
        %v876 = vunpack.c.l.b16 %v216
        %v877 = vunpack.c.h.b16 %v216
        %v878 = vunpack.c.l.b16 %v217
        %v879 = vunpack.c.h.b16 %v217
        %v880 = vunpack.c.l.b16 %v218
        %v881 = vunpack.c.h.b16 %v218
        %v882 = vunpack.c.l.b16 %v219
        %v883 = vunpack.c.h.b16 %v219
        %v884 = vunpack.c.l.b16 %v220
        %v885 = vunpack.c.h.b16 %v220
        %v886 = vunpack.c.l.b16 %v221
        %v887 = vunpack.c.h.b16 %v221
        %v888 = vunpack.c.l.b16 %v222
        %v889 = vunpack.c.h.b16 %v222
        %v890 = vunpack.c.l.b16 %v223
        %v891 = vunpack.c.h.b16 %v223
        %v892 = vunpack.c.l.b16 %v224
        %v893 = vunpack.c.h.b16 %v224
        %v894 = vunpack.c.l.b16 %v225
        %v895 = vunpack.c.h.b16 %v225
        %v896 = vunpack.c.l.b16 %v226
        %v897 = vunpack.c.h.b16 %v226
        %v898 = vunpack.c.l.b16 %v227
        %v899 = vunpack.c.h.b16 %v227
        %v900 = vunpack.c.l.b16 %v228
        %v901 = vunpack.c.h.b16 %v228
        %v902 = vunpack.c.l.b16 %v229
        %v903 = vunpack.c.h.b16 %v229
        %v904 = vunpack.c.l.b16 %v230
        %v905 = vunpack.c.h.b16 %v230
        %v906 = vunpack.c.l.b16 %v231
        %v907 = vunpack.c.h.b16 %v231
        %v908 = vunpack.c.l.b16 %v232
        %v909 = vunpack.c.h.b16 %v232
        %v910 = vunpack.c.l.b16 %v233
        %v911 = vunpack.c.h.b16 %v233
        %v912 = vunpack.c.l.b16 %v234
        %v913 = vunpack.c.h.b16 %v234
        %v914 = vunpack.c.l.b16 %v235
        %v915 = vunpack.c.h.b16 %v235
        %v916 = vunpack.c.l.b16 %v236
        %v917 = vunpack.c.h.b16 %v236
        %v918 = vunpack.c.l.b16 %v237
        %v919 = vunpack.c.h.b16 %v237
        %v920 = vunpack.c.l.b16 %v238
        %v921 = vunpack.c.h.b16 %v238
        %v922 = vunpack.c.l.b16 %v239
        %v923 = vunpack.c.h.b16 %v239
        %v924 = vunpack.c.l.b16 %v240
        %v925 = vunpack.c.h.b16 %v240
        %v926 = vunpack.c.l.b16 %v241
        %v927 = vunpack.c.h.b16 %v241
        %v928 = vunpack.c.l.b16 %v242
        %v929 = vunpack.c.h.b16 %v242
        %v930 = vunpack.c.l.b16 %v243
        %v931 = vunpack.c.h.b16 %v243
        %v932 = vunpack.c.l.b16 %v244
        %v933 = vunpack.c.h.b16 %v244
        %v934 = vunpack.c.l.b16 %v245
        %v935 = vunpack.c.h.b16 %v245
        %v936 = vunpack.c.l.b16 %v246
        %v937 = vunpack.c.h.b16 %v246
        %v938 = vunpack.c.l.b16 %v247
        %v939 = vunpack.c.h.b16 %v247
        %v940 = vunpack.c.l.b16 %v248
        %v941 = vunpack.c.h.b16 %v248
        %v942 = vunpack.c.l.b16 %v249
        %v943 = vunpack.c.h.b16 %v249
        %v944 = vunpack.c.l.b16 %v250
        %v945 = vunpack.c.h.b16 %v250
        %v946 = vunpack.c.l.b16 %v251
        %v947 = vunpack.c.h.b16 %v251
        %v948 = vunpack.c.l.b16 %v252
        %v949 = vunpack.c.h.b16 %v252
        %v950 = vunpack.c.l.b16 %v253
        %v951 = vunpack.c.h.b16 %v253
        %v952 = vunpack.c.l.b16 %v254
        %v953 = vunpack.c.h.b16 %v254
        %v954 = vunpack.c.l.b16 %v255
        %v955 = vunpack.c.h.b16 %v255
        %v956 = vunpack.c.l.b16 %v256
        %v957 = vunpack.c.h.b16 %v256
        %v958 = vunpack.c.l.b16 %v257
        %v959 = vunpack.c.h.b16 %v257
        %v960 = vunpack.c.l.b16 %v258
        %v961 = vunpack.c.h.b16 %v258
        %v962 = vunpack.c.l.b16 %v259
        %v963 = vunpack.c.h.b16 %v259
        %v964 = vpack.c.b16 %v852, %v836
        %v965 = vpack.c.b16 %v853, %v837
        %v966 = vpack.c.b16 %v854, %v838
        %v967 = vpack.c.b16 %v855, %v839
        %v968 = vpack.c.b16 %v856, %v840
        %v969 = vpack.c.b16 %v857, %v841
        %v970 = vpack.c.b16 %v858, %v842
        %v971 = vpack.c.b16 %v859, %v843
        %v972 = vpack.c.b16 %v860, %v844
        %v973 = vpack.c.b16 %v861, %v845
        %v974 = vpack.c.b16 %v862, %v846
        %v975 = vpack.c.b16 %v863, %v847
        %v976 = vpack.c.b16 %v864, %v848
        %v977 = vpack.c.b16 %v865, %v849
        %v978 = vpack.c.b16 %v866, %v850
        %v979 = vpack.c.b16 %v867, %v851
        %v980 = vpack.c.b16 %v884, %v868
        %v981 = vpack.c.b16 %v885, %v869
        %v982 = vpack.c.b16 %v886, %v870
        %v983 = vpack.c.b16 %v887, %v871
        %v984 = vpack.c.b16 %v888, %v872
        %v985 = vpack.c.b16 %v889, %v873
        %v986 = vpack.c.b16 %v890, %v874
        %v987 = vpack.c.b16 %v891, %v875
        %v988 = vpack.c.b16 %v892, %v876
        %v989 = vpack.c.b16 %v893, %v877
        %v990 = vpack.c.b16 %v894, %v878
        %v991 = vpack.c.b16 %v895, %v879
        %v992 = vpack.c.b16 %v896, %v880
        %v993 = vpack.c.b16 %v897, %v881
        %v994 = vpack.c.b16 %v898, %v882
        %v995 = vpack.c.b16 %v899, %v883
        %v996 = vpack.c.b16 %v916, %v900
        %v997 = vpack.c.b16 %v917, %v901
        %v998 = vpack.c.b16 %v918, %v902
        %v999 = vpack.c.b16 %v919, %v903
        %v1000 = vpack.c.b16 %v920, %v904
        %v1001 = vpack.c.b16 %v921, %v905
        %v1002 = vpack.c.b16 %v922, %v906
        %v1003 = vpack.c.b16 %v923, %v907
        %v1004 = vpack.c.b16 %v924, %v908
        %v1005 = vpack.c.b16 %v925, %v909
        %v1006 = vpack.c.b16 %v926, %v910
        %v1007 = vpack.c.b16 %v927, %v911
        %v1008 = vpack.c.b16 %v928, %v912
        %v1009 = vpack.c.b16 %v929, %v913
        %v1010 = vpack.c.b16 %v930, %v914
        %v1011 = vpack.c.b16 %v931, %v915
        %v1012 = vpack.c.b16 %v948, %v932
        %v1013 = vpack.c.b16 %v949, %v933
        %v1014 = vpack.c.b16 %v950, %v934
        %v1015 = vpack.c.b16 %v951, %v935
        %v1016 = vpack.c.b16 %v952, %v936
        %v1017 = vpack.c.b16 %v953, %v937
        %v1018 = vpack.c.b16 %v954, %v938
        %v1019 = vpack.c.b16 %v955, %v939
        %v1020 = vpack.c.b16 %v956, %v940
        %v1021 = vpack.c.b16 %v957, %v941
        %v1022 = vpack.c.b16 %v958, %v942
        %v1023 = vpack.c.b16 %v959, %v943
        %v1024 = vpack.c.b16 %v960, %v944
        %v1025 = vpack.c.b16 %v961, %v945
        %v1026 = vpack.c.b16 %v962, %v946
        %v1027 = vpack.c.b16 %v963, %v947
        %v1348 = vunpack.c.l.b16 %v516
        %v1349 = vunpack.c.l.b16 %v517
        %v1350 = vunpack.c.l.b16 %v518
        %v1351 = vunpack.c.l.b16 %v519
        %v1352 = vunpack.c.l.b16 %v520
        %v1353 = vunpack.c.l.b16 %v521
        %v1354 = vunpack.c.l.b16 %v522
        %v1355 = vunpack.c.l.b16 %v523
        %v1356 = vunpack.c.l.b16 %v524
        %v1357 = vunpack.c.l.b16 %v525
        %v1358 = vunpack.c.l.b16 %v526
        %v1359 = vunpack.c.l.b16 %v527
        %v1360 = vunpack.c.l.b16 %v528
        %v1361 = vunpack.c.l.b16 %v529
        %v1362 = vunpack.c.l.b16 %v530
        %v1363 = vunpack.c.l.b16 %v531
        %v1364 = vunpack.c.l.b16 %v532
        %v1365 = vunpack.c.l.b16 %v533
        %v1366 = vunpack.c.l.b16 %v534
        %v1367 = vunpack.c.l.b16 %v535
        %v1368 = vunpack.c.l.b16 %v536
        %v1369 = vunpack.c.l.b16 %v537
        %v1370 = vunpack.c.l.b16 %v538
        %v1371 = vunpack.c.l.b16 %v539
        %v1372 = vunpack.c.l.b16 %v540
        %v1373 = vunpack.c.l.b16 %v541
        %v1374 = vunpack.c.l.b16 %v542
        %v1375 = vunpack.c.l.b16 %v543
        %v1376 = vunpack.c.l.b16 %v544
        %v1377 = vunpack.c.l.b16 %v545
        %v1378 = vunpack.c.l.b16 %v546
        %v1379 = vunpack.c.l.b16 %v547
        %v1380 = vunpack.c.l.b16 %v548
        %v1381 = vunpack.c.l.b16 %v549
        %v1382 = vunpack.c.l.b16 %v550
        %v1383 = vunpack.c.l.b16 %v551
        %v1384 = vunpack.c.l.b16 %v552
        %v1385 = vunpack.c.l.b16 %v553
        %v1386 = vunpack.c.l.b16 %v554
        %v1387 = vunpack.c.l.b16 %v555
        %v1388 = vunpack.c.l.b16 %v556
        %v1389 = vunpack.c.l.b16 %v557
        %v1390 = vunpack.c.l.b16 %v558
        %v1391 = vunpack.c.l.b16 %v559
        %v1392 = vunpack.c.l.b16 %v560
        %v1393 = vunpack.c.l.b16 %v561
        %v1394 = vunpack.c.l.b16 %v562
        %v1395 = vunpack.c.l.b16 %v563
        %v1396 = vunpack.c.l.b16 %v564
        %v1397 = vunpack.c.l.b16 %v565
        %v1398 = vunpack.c.l.b16 %v566
        %v1399 = vunpack.c.l.b16 %v567
        %v1400 = vunpack.c.l.b16 %v568
        %v1401 = vunpack.c.l.b16 %v569
        %v1402 = vunpack.c.l.b16 %v570
        %v1403 = vunpack.c.l.b16 %v571
        %v1404 = vunpack.c.l.b16 %v572
        %v1405 = vunpack.c.l.b16 %v573
        %v1406 = vunpack.c.l.b16 %v574
        %v1407 = vunpack.c.l.b16 %v575
        %v1408 = vunpack.c.l.b16 %v576
        %v1409 = vunpack.c.l.b16 %v577
        %v1410 = vunpack.c.l.b16 %v578
        %v1411 = vunpack.c.l.b16 %v579
        %v1412 = vunpack.c.l.b16 %v580
        %v1413 = vunpack.c.l.b16 %v581
        %v1414 = vunpack.c.l.b16 %v582
        %v1415 = vunpack.c.l.b16 %v583
        %v1416 = vunpack.c.l.b16 %v584
        %v1417 = vunpack.c.l.b16 %v585
        %v1418 = vunpack.c.l.b16 %v586
        %v1419 = vunpack.c.l.b16 %v587
        %v1420 = vunpack.c.l.b16 %v588
        %v1421 = vunpack.c.l.b16 %v589
        %v1422 = vunpack.c.l.b16 %v590
        %v1423 = vunpack.c.l.b16 %v591
        %v1424 = vunpack.c.l.b16 %v592
        %v1425 = vunpack.c.l.b16 %v593
        %v1426 = vunpack.c.l.b16 %v594
        %v1427 = vunpack.c.l.b16 %v595
        %v1428 = vunpack.c.l.b16 %v596
        %v1429 = vunpack.c.l.b16 %v597
        %v1430 = vunpack.c.l.b16 %v598
        %v1431 = vunpack.c.l.b16 %v599
        %v1432 = vunpack.c.l.b16 %v600
        %v1433 = vunpack.c.l.b16 %v601
        %v1434 = vunpack.c.l.b16 %v602
        %v1435 = vunpack.c.l.b16 %v603
        %v1436 = vunpack.c.l.b16 %v604
        %v1437 = vunpack.c.l.b16 %v605
        %v1438 = vunpack.c.l.b16 %v606
        %v1439 = vunpack.c.l.b16 %v607
        %v1440 = vunpack.c.l.b16 %v608
        %v1441 = vunpack.c.l.b16 %v609
        %v1442 = vunpack.c.l.b16 %v610
        %v1443 = vunpack.c.l.b16 %v611
        %v1444 = vunpack.c.l.b16 %v612
        %v1445 = vunpack.c.l.b16 %v613
        %v1446 = vunpack.c.l.b16 %v614
        %v1447 = vunpack.c.l.b16 %v615
        %v1448 = vunpack.c.l.b16 %v616
        %v1449 = vunpack.c.l.b16 %v617
        %v1450 = vunpack.c.l.b16 %v618
        %v1451 = vunpack.c.l.b16 %v619
        %v1452 = vunpack.c.l.b16 %v620
        %v1453 = vunpack.c.l.b16 %v621
        %v1454 = vunpack.c.l.b16 %v622
        %v1455 = vunpack.c.l.b16 %v623
        %v1456 = vunpack.c.l.b16 %v624
        %v1457 = vunpack.c.l.b16 %v625
        %v1458 = vunpack.c.l.b16 %v626
        %v1459 = vunpack.c.l.b16 %v627
        %v1460 = vunpack.c.l.b16 %v628
        %v1461 = vunpack.c.l.b16 %v629
        %v1462 = vunpack.c.l.b16 %v630
        %v1463 = vunpack.c.l.b16 %v631
        %v1464 = vunpack.c.l.b16 %v632
        %v1465 = vunpack.c.l.b16 %v633
        %v1466 = vunpack.c.l.b16 %v634
        %v1467 = vunpack.c.l.b16 %v635
        %v1468 = vunpack.c.l.b16 %v636
        %v1469 = vunpack.c.l.b16 %v637
        %v1470 = vunpack.c.l.b16 %v638
        %v1471 = vunpack.c.l.b16 %v639
        %v1472 = vunpack.c.l.b16 %v640
        %v1473 = vunpack.c.l.b16 %v641
        %v1474 = vunpack.c.l.b16 %v642
        %v1475 = vunpack.c.l.b16 %v643
        %v1476 = vunpack.c.l.b16 %v644
        %v1477 = vunpack.c.l.b16 %v645
        %v1478 = vunpack.c.l.b16 %v646
        %v1479 = vunpack.c.l.b16 %v647
        %v1480 = vunpack.c.l.b16 %v648
        %v1481 = vunpack.c.l.b16 %v649
        %v1482 = vunpack.c.l.b16 %v650
        %v1483 = vunpack.c.l.b16 %v651
        %v1484 = vunpack.c.l.b16 %v652
        %v1485 = vunpack.c.l.b16 %v653
        %v1486 = vunpack.c.l.b16 %v654
        %v1487 = vunpack.c.l.b16 %v655
        %v1488 = vunpack.c.l.b16 %v656
        %v1489 = vunpack.c.l.b16 %v657
        %v1490 = vunpack.c.l.b16 %v658
        %v1491 = vunpack.c.l.b16 %v659
        %v1492 = vunpack.c.l.b16 %v660
        %v1493 = vunpack.c.l.b16 %v661
        %v1494 = vunpack.c.l.b16 %v662
        %v1495 = vunpack.c.l.b16 %v663
        %v1496 = vunpack.c.l.b16 %v664
        %v1497 = vunpack.c.l.b16 %v665
        %v1498 = vunpack.c.l.b16 %v666
        %v1499 = vunpack.c.l.b16 %v667
        %v1500 = vunpack.c.l.b16 %v668
        %v1501 = vunpack.c.l.b16 %v669
        %v1502 = vunpack.c.l.b16 %v670
        %v1503 = vunpack.c.l.b16 %v671
        %v1504 = vunpack.c.l.b16 %v672
        %v1505 = vunpack.c.l.b16 %v673
        %v1506 = vunpack.c.l.b16 %v674
        %v1507 = vunpack.c.l.b16 %v675
        %v1508 = vunpack.c.l.b16 %v676
        %v1509 = vunpack.c.l.b16 %v677
        %v1510 = vunpack.c.l.b16 %v678
        %v1511 = vunpack.c.l.b16 %v679
        %v1512 = vunpack.c.l.b16 %v680
        %v1513 = vunpack.c.l.b16 %v681
        %v1514 = vunpack.c.l.b16 %v682
        %v1515 = vunpack.c.l.b16 %v683
        %v1516 = vunpack.c.l.b16 %v684
        %v1517 = vunpack.c.l.b16 %v685
        %v1518 = vunpack.c.l.b16 %v686
        %v1519 = vunpack.c.l.b16 %v687
        %v1520 = vunpack.c.l.b16 %v688
        %v1521 = vunpack.c.l.b16 %v689
        %v1522 = vunpack.c.l.b16 %v690
        %v1523 = vunpack.c.l.b16 %v691
        %v1524 = vunpack.c.l.b16 %v692
        %v1525 = vunpack.c.l.b16 %v693
        %v1526 = vunpack.c.l.b16 %v694
        %v1527 = vunpack.c.l.b16 %v695
        %v1528 = vunpack.c.l.b16 %v696
        %v1529 = vunpack.c.l.b16 %v697
        %v1530 = vunpack.c.l.b16 %v698
        %v1531 = vunpack.c.l.b16 %v699
        %v1532 = vunpack.c.l.b16 %v700
        %v1533 = vunpack.c.l.b16 %v701
        %v1534 = vunpack.c.l.b16 %v702
        %v1535 = vunpack.c.l.b16 %v703
        %v1536 = vunpack.c.l.b16 %v704
        %v1537 = vunpack.c.l.b16 %v705
        %v1538 = vunpack.c.l.b16 %v706
        %v1539 = vunpack.c.l.b16 %v707
        %v1540 = vunpack.c.l.b16 %v708
        %v1541 = vunpack.c.l.b16 %v709
        %v1542 = vunpack.c.l.b16 %v710
        %v1543 = vunpack.c.l.b16 %v711
        %v1544 = vunpack.c.l.b16 %v712
        %v1545 = vunpack.c.l.b16 %v713
        %v1546 = vunpack.c.l.b16 %v714
        %v1547 = vunpack.c.l.b16 %v715
        %v1548 = vunpack.c.l.b16 %v716
        %v1549 = vunpack.c.l.b16 %v717
        %v1550 = vunpack.c.l.b16 %v718
        %v1551 = vunpack.c.l.b16 %v719
        %v1552 = vunpack.c.l.b16 %v720
        %v1553 = vunpack.c.l.b16 %v721
        %v1554 = vunpack.c.l.b16 %v722
        %v1555 = vunpack.c.l.b16 %v723
        %v1556 = vunpack.c.l.b16 %v724
        %v1557 = vunpack.c.l.b16 %v725
        %v1558 = vunpack.c.l.b16 %v726
        %v1559 = vunpack.c.l.b16 %v727
        %v1560 = vunpack.c.l.b16 %v728
        %v1561 = vunpack.c.l.b16 %v729
        %v1562 = vunpack.c.l.b16 %v730
        %v1563 = vunpack.c.l.b16 %v731
        %v1564 = vunpack.c.l.b16 %v732
        %v1565 = vunpack.c.l.b16 %v733
        %v1566 = vunpack.c.l.b16 %v734
        %v1567 = vunpack.c.l.b16 %v735
        %v1568 = vunpack.c.l.b16 %v736
        %v1569 = vunpack.c.l.b16 %v737
        %v1570 = vunpack.c.l.b16 %v738
        %v1571 = vunpack.c.l.b16 %v739
        %v1572 = vunpack.c.l.b16 %v740
        %v1573 = vunpack.c.l.b16 %v741
        %v1574 = vunpack.c.l.b16 %v742
        %v1575 = vunpack.c.l.b16 %v743
        %v1576 = vunpack.c.l.b16 %v744
        %v1577 = vunpack.c.l.b16 %v745
        %v1578 = vunpack.c.l.b16 %v746
        %v1579 = vunpack.c.l.b16 %v747
        %v1580 = vunpack.c.l.b16 %v748
        %v1581 = vunpack.c.l.b16 %v749
        %v1582 = vunpack.c.l.b16 %v750
        %v1583 = vunpack.c.l.b16 %v751
        %v1584 = vunpack.c.l.b16 %v752
        %v1585 = vunpack.c.l.b16 %v753
        %v1586 = vunpack.c.l.b16 %v754
        %v1587 = vunpack.c.l.b16 %v755
        %v1588 = vunpack.c.l.b16 %v756
        %v1589 = vunpack.c.l.b16 %v757
        %v1590 = vunpack.c.l.b16 %v758
        %v1591 = vunpack.c.l.b16 %v759
        %v1592 = vunpack.c.l.b16 %v760
        %v1593 = vunpack.c.l.b16 %v761
        %v1594 = vunpack.c.l.b16 %v762
        %v1595 = vunpack.c.l.b16 %v763
        %v1596 = vunpack.c.l.b16 %v764
        %v1597 = vunpack.c.l.b16 %v765
        %v1598 = vunpack.c.l.b16 %v766
        %v1599 = vunpack.c.l.b16 %v767
        %v1600 = vunpack.c.l.b16 %v768
        %v1601 = vunpack.c.l.b16 %v769
        %v1602 = vunpack.c.l.b16 %v770
        %v1603 = vunpack.c.l.b16 %v771
        %v1604 = vpack.c.b16 %v1349, %v1348
        %v1605 = vpack.c.b16 %v1351, %v1350
        %v1606 = vpack.c.b16 %v1353, %v1352
        %v1607 = vpack.c.b16 %v1355, %v1354
        %v1608 = vpack.c.b16 %v1357, %v1356
        %v1609 = vpack.c.b16 %v1359, %v1358
        %v1610 = vpack.c.b16 %v1361, %v1360
        %v1611 = vpack.c.b16 %v1363, %v1362
        %v1612 = vpack.c.b16 %v1365, %v1364
        %v1613 = vpack.c.b16 %v1367, %v1366
        %v1614 = vpack.c.b16 %v1369, %v1368
        %v1615 = vpack.c.b16 %v1371, %v1370
        %v1616 = vpack.c.b16 %v1373, %v1372
        %v1617 = vpack.c.b16 %v1375, %v1374
        %v1618 = vpack.c.b16 %v1377, %v1376
        %v1619 = vpack.c.b16 %v1379, %v1378
        %v1620 = vpack.c.b16 %v1381, %v1380
        %v1621 = vpack.c.b16 %v1383, %v1382
        %v1622 = vpack.c.b16 %v1385, %v1384
        %v1623 = vpack.c.b16 %v1387, %v1386
        %v1624 = vpack.c.b16 %v1389, %v1388
        %v1625 = vpack.c.b16 %v1391, %v1390
        %v1626 = vpack.c.b16 %v1393, %v1392
        %v1627 = vpack.c.b16 %v1395, %v1394
        %v1628 = vpack.c.b16 %v1397, %v1396
        %v1629 = vpack.c.b16 %v1399, %v1398
        %v1630 = vpack.c.b16 %v1401, %v1400
        %v1631 = vpack.c.b16 %v1403, %v1402
        %v1632 = vpack.c.b16 %v1405, %v1404
        %v1633 = vpack.c.b16 %v1407, %v1406
        %v1634 = vpack.c.b16 %v1409, %v1408
        %v1635 = vpack.c.b16 %v1411, %v1410
        %v1636 = vpack.c.b16 %v1413, %v1412
        %v1637 = vpack.c.b16 %v1415, %v1414
        %v1638 = vpack.c.b16 %v1417, %v1416
        %v1639 = vpack.c.b16 %v1419, %v1418
        %v1640 = vpack.c.b16 %v1421, %v1420
        %v1641 = vpack.c.b16 %v1423, %v1422
        %v1642 = vpack.c.b16 %v1425, %v1424
        %v1643 = vpack.c.b16 %v1427, %v1426
        %v1644 = vpack.c.b16 %v1429, %v1428
        %v1645 = vpack.c.b16 %v1431, %v1430
        %v1646 = vpack.c.b16 %v1433, %v1432
        %v1647 = vpack.c.b16 %v1435, %v1434
        %v1648 = vpack.c.b16 %v1437, %v1436
        %v1649 = vpack.c.b16 %v1439, %v1438
        %v1650 = vpack.c.b16 %v1441, %v1440
        %v1651 = vpack.c.b16 %v1443, %v1442
        %v1652 = vpack.c.b16 %v1445, %v1444
        %v1653 = vpack.c.b16 %v1447, %v1446
        %v1654 = vpack.c.b16 %v1449, %v1448
        %v1655 = vpack.c.b16 %v1451, %v1450
        %v1656 = vpack.c.b16 %v1453, %v1452
        %v1657 = vpack.c.b16 %v1455, %v1454
        %v1658 = vpack.c.b16 %v1457, %v1456
        %v1659 = vpack.c.b16 %v1459, %v1458
        %v1660 = vpack.c.b16 %v1461, %v1460
        %v1661 = vpack.c.b16 %v1463, %v1462
        %v1662 = vpack.c.b16 %v1465, %v1464
        %v1663 = vpack.c.b16 %v1467, %v1466
        %v1664 = vpack.c.b16 %v1469, %v1468
        %v1665 = vpack.c.b16 %v1471, %v1470
        %v1666 = vpack.c.b16 %v1473, %v1472
        %v1667 = vpack.c.b16 %v1475, %v1474
        %v1668 = vpack.c.b16 %v1477, %v1476
        %v1669 = vpack.c.b16 %v1479, %v1478
        %v1670 = vpack.c.b16 %v1481, %v1480
        %v1671 = vpack.c.b16 %v1483, %v1482
        %v1672 = vpack.c.b16 %v1485, %v1484
        %v1673 = vpack.c.b16 %v1487, %v1486
        %v1674 = vpack.c.b16 %v1489, %v1488
        %v1675 = vpack.c.b16 %v1491, %v1490
        %v1676 = vpack.c.b16 %v1493, %v1492
        %v1677 = vpack.c.b16 %v1495, %v1494
        %v1678 = vpack.c.b16 %v1497, %v1496
        %v1679 = vpack.c.b16 %v1499, %v1498
        %v1680 = vpack.c.b16 %v1501, %v1500
        %v1681 = vpack.c.b16 %v1503, %v1502
        %v1682 = vpack.c.b16 %v1505, %v1504
        %v1683 = vpack.c.b16 %v1507, %v1506
        %v1684 = vpack.c.b16 %v1509, %v1508
        %v1685 = vpack.c.b16 %v1511, %v1510
        %v1686 = vpack.c.b16 %v1513, %v1512
        %v1687 = vpack.c.b16 %v1515, %v1514
        %v1688 = vpack.c.b16 %v1517, %v1516
        %v1689 = vpack.c.b16 %v1519, %v1518
        %v1690 = vpack.c.b16 %v1521, %v1520
        %v1691 = vpack.c.b16 %v1523, %v1522
        %v1692 = vpack.c.b16 %v1525, %v1524
        %v1693 = vpack.c.b16 %v1527, %v1526
        %v1694 = vpack.c.b16 %v1529, %v1528
        %v1695 = vpack.c.b16 %v1531, %v1530
        %v1696 = vpack.c.b16 %v1533, %v1532
        %v1697 = vpack.c.b16 %v1535, %v1534
        %v1698 = vpack.c.b16 %v1537, %v1536
        %v1699 = vpack.c.b16 %v1539, %v1538
        %v1700 = vpack.c.b16 %v1541, %v1540
        %v1701 = vpack.c.b16 %v1543, %v1542
        %v1702 = vpack.c.b16 %v1545, %v1544
        %v1703 = vpack.c.b16 %v1547, %v1546
        %v1704 = vpack.c.b16 %v1549, %v1548
        %v1705 = vpack.c.b16 %v1551, %v1550
        %v1706 = vpack.c.b16 %v1553, %v1552
        %v1707 = vpack.c.b16 %v1555, %v1554
        %v1708 = vpack.c.b16 %v1557, %v1556
        %v1709 = vpack.c.b16 %v1559, %v1558
        %v1710 = vpack.c.b16 %v1561, %v1560
        %v1711 = vpack.c.b16 %v1563, %v1562
        %v1712 = vpack.c.b16 %v1565, %v1564
        %v1713 = vpack.c.b16 %v1567, %v1566
        %v1714 = vpack.c.b16 %v1569, %v1568
        %v1715 = vpack.c.b16 %v1571, %v1570
        %v1716 = vpack.c.b16 %v1573, %v1572
        %v1717 = vpack.c.b16 %v1575, %v1574
        %v1718 = vpack.c.b16 %v1577, %v1576
        %v1719 = vpack.c.b16 %v1579, %v1578
        %v1720 = vpack.c.b16 %v1581, %v1580
        %v1721 = vpack.c.b16 %v1583, %v1582
        %v1722 = vpack.c.b16 %v1585, %v1584
        %v1723 = vpack.c.b16 %v1587, %v1586
        %v1724 = vpack.c.b16 %v1589, %v1588
        %v1725 = vpack.c.b16 %v1591, %v1590
        %v1726 = vpack.c.b16 %v1593, %v1592
        %v1727 = vpack.c.b16 %v1595, %v1594
        %v1728 = vpack.c.b16 %v1597, %v1596
        %v1729 = vpack.c.b16 %v1599, %v1598
        %v1730 = vpack.c.b16 %v1601, %v1600
        %v1731 = vpack.c.b16 %v1603, %v1602
        %1860 = vmatprep.subr.bf16.mxu0 0
        %1861 = vmatpush1.bf16.msra.mxu0 %v1611
        %1862 = vmatprep.subr.bf16.mxu0 0
        %1863 = vmatpush1.bf16.msra.mxu0 %v1610
        %1864 = vmatprep.subr.bf16.mxu0 0
        %1865 = vmatpush1.bf16.msra.mxu0 %v1609
        %1866 = vmatprep.subr.bf16.mxu0 0
        %1867 = vmatpush1.bf16.msra.mxu0 %v1608
        %1868 = vmatprep.subr.bf16.mxu0 0
        %1869 = vmatpush1.bf16.msra.mxu0 %v1607
        %1870 = vmatprep.subr.bf16.mxu0 0
        %1871 = vmatpush1.bf16.msra.mxu0 %v1606
        %1872 = vmatprep.subr.bf16.mxu0 0
        %1873 = vmatpush1.bf16.msra.mxu0 %v1605
        %1874 = vmatprep.subr.bf16.mxu0 0
        %1875 = vmatpush1.bf16.msra.mxu0 %v1604
        %1876 = vmatprep.subr.bf16.mxu0 0
        %1877 = vmatpush2.bf16.msra.mxu0 %v1619
        %1878 = vmatprep.subr.bf16.mxu0 0
        %1879 = vmatpush2.bf16.msra.mxu0 %v1618
        %1880 = vmatprep.subr.bf16.mxu0 0
        %1881 = vmatpush2.bf16.msra.mxu0 %v1617
        %1882 = vmatprep.subr.bf16.mxu0 0
        %1883 = vmatpush2.bf16.msra.mxu0 %v1616
        %1884 = vmatprep.subr.bf16.mxu0 0
        %1885 = vmatpush2.bf16.msra.mxu0 %v1615
        %1886 = vmatprep.subr.bf16.mxu0 0
        %1887 = vmatpush2.bf16.msra.mxu0 %v1614
        %1888 = vmatprep.subr.bf16.mxu0 0
        %1889 = vmatpush2.bf16.msra.mxu0 %v1613
        %1890 = vmatprep.subr.bf16.mxu0 0
        %1891 = vmatpush2.bf16.msra.mxu0 %v1612
        %1892 = vmatprep.mubr.bf16.mxu0 %v965
        %1893 = vmatmul.mubr.bf16.gmra.mxu0 %v964
        %v1894 = vpop.f32.mrf.mxu0
        %v1895 = vadd.f32 0.0, %v1894
        %v1896 = vpop.f32.mrf.mxu0
        %v1897 = vpop.f32.mrf.mxu0
        %v1898 = vadd.f32 0.0, %v1897
        %v1899 = vpop.f32.mrf.mxu0
        %1900 = vmatprep.mubr.bf16.mxu0 %v981
        %1901 = vmatmul.mubr.bf16.gmra.mxu0 %v980
        %v1902 = vpop.f32.mrf.mxu0
        %v1903 = vadd.f32 0.0, %v1902
        %v1904 = vpop.f32.mrf.mxu0
        %v1905 = vpop.f32.mrf.mxu0
        %v1906 = vadd.f32 0.0, %v1905
        %v1907 = vpop.f32.mrf.mxu0
        %1908 = vmatprep.mubr.bf16.mxu0 %v997
        %1909 = vmatmul.mubr.bf16.gmra.mxu0 %v996
        %v1910 = vpop.f32.mrf.mxu0
        %v1911 = vadd.f32 0.0, %v1910
        %v1912 = vpop.f32.mrf.mxu0
        %v1913 = vpop.f32.mrf.mxu0
        %v1914 = vadd.f32 0.0, %v1913
        %v1915 = vpop.f32.mrf.mxu0
        %1916 = vmatprep.mubr.bf16.mxu0 %v1013
        %1917 = vmatmul.mubr.bf16.gmra.mxu0 %v1012
        %v1918 = vpop.f32.mrf.mxu0
        %v1919 = vadd.f32 0.0, %v1918
        %v1920 = vpop.f32.mrf.mxu0
        %v1921 = vpop.f32.mrf.mxu0
        %v1922 = vadd.f32 0.0, %v1921
        %v1923 = vpop.f32.mrf.mxu0
        %1924 = vdwg.mxu0
        %1925 = vmatprep.subr.bf16.mxu0 0
        %1926 = vmatpush1.bf16.msra.mxu0 %v1627
        %1927 = vmatprep.subr.bf16.mxu0 0
        %1928 = vmatpush1.bf16.msra.mxu0 %v1626
        %1929 = vmatprep.subr.bf16.mxu0 0
        %1930 = vmatpush1.bf16.msra.mxu0 %v1625
        %1931 = vmatprep.subr.bf16.mxu0 0
        %1932 = vmatpush1.bf16.msra.mxu0 %v1624
        %1933 = vmatprep.subr.bf16.mxu0 0
        %1934 = vmatpush1.bf16.msra.mxu0 %v1623
        %1935 = vmatprep.subr.bf16.mxu0 0
        %1936 = vmatpush1.bf16.msra.mxu0 %v1622
        %1937 = vmatprep.subr.bf16.mxu0 0
        %1938 = vmatpush1.bf16.msra.mxu0 %v1621
        %1939 = vmatprep.subr.bf16.mxu0 0
        %1940 = vmatpush1.bf16.msra.mxu0 %v1620
        %1941 = vmatprep.subr.bf16.mxu0 0
        %1942 = vmatpush2.bf16.msra.mxu0 %v1635
        %1943 = vmatprep.subr.bf16.mxu0 0
        %1944 = vmatpush2.bf16.msra.mxu0 %v1634
        %1945 = vmatprep.subr.bf16.mxu0 0
        %1946 = vmatpush2.bf16.msra.mxu0 %v1633
        %1947 = vmatprep.subr.bf16.mxu0 0
        %1948 = vmatpush2.bf16.msra.mxu0 %v1632
        %1949 = vmatprep.subr.bf16.mxu0 0
        %1950 = vmatpush2.bf16.msra.mxu0 %v1631
        %1951 = vmatprep.subr.bf16.mxu0 0
        %1952 = vmatpush2.bf16.msra.mxu0 %v1630
        %1953 = vmatprep.subr.bf16.mxu0 0
        %1954 = vmatpush2.bf16.msra.mxu0 %v1629
        %1955 = vmatprep.subr.bf16.mxu0 0
        %1956 = vmatpush2.bf16.msra.mxu0 %v1628
        %1957 = vmatprep.mubr.bf16.mxu0 %v967
        %1958 = vmatmul.mubr.bf16.gmra.mxu0 %v966
        %v1959 = vpop.f32.mrf.mxu0
        %v1960 = vadd.f32 %v1895, %v1959
        %v1961 = vpop.f32.mrf.mxu0
        %v1962 = vpop.f32.mrf.mxu0
        %v1963 = vadd.f32 %v1898, %v1962
        %v1964 = vpop.f32.mrf.mxu0
        %1965 = vmatprep.mubr.bf16.mxu0 %v983
        %1966 = vmatmul.mubr.bf16.gmra.mxu0 %v982
        %v1967 = vpop.f32.mrf.mxu0
        %v1968 = vadd.f32 %v1903, %v1967
        %v1969 = vpop.f32.mrf.mxu0
        %v1970 = vpop.f32.mrf.mxu0
        %v1971 = vadd.f32 %v1906, %v1970
        %v1972 = vpop.f32.mrf.mxu0
        %1973 = vmatprep.mubr.bf16.mxu0 %v999
        %1974 = vmatmul.mubr.bf16.gmra.mxu0 %v998
        %v1975 = vpop.f32.mrf.mxu0
        %v1976 = vadd.f32 %v1911, %v1975
        %v1977 = vpop.f32.mrf.mxu0
        %v1978 = vpop.f32.mrf.mxu0
        %v1979 = vadd.f32 %v1914, %v1978
        %v1980 = vpop.f32.mrf.mxu0
        %1981 = vmatprep.mubr.bf16.mxu0 %v1015
        %1982 = vmatmul.mubr.bf16.gmra.mxu0 %v1014
        %v1983 = vpop.f32.mrf.mxu0
        %v1984 = vadd.f32 %v1919, %v1983
        %v1985 = vpop.f32.mrf.mxu0
        %v1986 = vpop.f32.mrf.mxu0
        %v1987 = vadd.f32 %v1922, %v1986
        %v1988 = vpop.f32.mrf.mxu0
        %1989 = vdwg.mxu0
        %1990 = vmatprep.subr.bf16.mxu0 0
        %1991 = vmatpush1.bf16.msra.mxu0 %v1643
        %1992 = vmatprep.subr.bf16.mxu0 0
        %1993 = vmatpush1.bf16.msra.mxu0 %v1642
        %1994 = vmatprep.subr.bf16.mxu0 0
        %1995 = vmatpush1.bf16.msra.mxu0 %v1641
        %1996 = vmatprep.subr.bf16.mxu0 0
        %1997 = vmatpush1.bf16.msra.mxu0 %v1640
        %1998 = vmatprep.subr.bf16.mxu0 0
        %1999 = vmatpush1.bf16.msra.mxu0 %v1639
        %2000 = vmatprep.subr.bf16.mxu0 0
        %2001 = vmatpush1.bf16.msra.mxu0 %v1638
        %2002 = vmatprep.subr.bf16.mxu0 0
        %2003 = vmatpush1.bf16.msra.mxu0 %v1637
        %2004 = vmatprep.subr.bf16.mxu0 0
        %2005 = vmatpush1.bf16.msra.mxu0 %v1636
        %2006 = vmatprep.subr.bf16.mxu0 0
        %2007 = vmatpush2.bf16.msra.mxu0 %v1651
        %2008 = vmatprep.subr.bf16.mxu0 0
        %2009 = vmatpush2.bf16.msra.mxu0 %v1650
        %2010 = vmatprep.subr.bf16.mxu0 0
        %2011 = vmatpush2.bf16.msra.mxu0 %v1649
        %2012 = vmatprep.subr.bf16.mxu0 0
        %2013 = vmatpush2.bf16.msra.mxu0 %v1648
        %2014 = vmatprep.subr.bf16.mxu0 0
        %2015 = vmatpush2.bf16.msra.mxu0 %v1647
        %2016 = vmatprep.subr.bf16.mxu0 0
        %2017 = vmatpush2.bf16.msra.mxu0 %v1646
        %2018 = vmatprep.subr.bf16.mxu0 0
        %2019 = vmatpush2.bf16.msra.mxu0 %v1645
        %2020 = vmatprep.subr.bf16.mxu0 0
        %2021 = vmatpush2.bf16.msra.mxu0 %v1644
        %2022 = vmatprep.mubr.bf16.mxu0 %v969
        %2023 = vmatmul.mubr.bf16.gmra.mxu0 %v968
        %v2024 = vpop.f32.mrf.mxu0
        %v2025 = vadd.f32 %v1960, %v2024
        %v2026 = vpop.f32.mrf.mxu0
        %v2027 = vpop.f32.mrf.mxu0
        %v2028 = vadd.f32 %v1963, %v2027
        %v2029 = vpop.f32.mrf.mxu0
        %2030 = vmatprep.mubr.bf16.mxu0 %v985
        %2031 = vmatmul.mubr.bf16.gmra.mxu0 %v984
        %v2032 = vpop.f32.mrf.mxu0
        %v2033 = vadd.f32 %v1968, %v2032
        %v2034 = vpop.f32.mrf.mxu0
        %v2035 = vpop.f32.mrf.mxu0
        %v2036 = vadd.f32 %v1971, %v2035
        %v2037 = vpop.f32.mrf.mxu0
        %2038 = vmatprep.mubr.bf16.mxu0 %v1001
        %2039 = vmatmul.mubr.bf16.gmra.mxu0 %v1000
        %v2040 = vpop.f32.mrf.mxu0
        %v2041 = vadd.f32 %v1976, %v2040
        %v2042 = vpop.f32.mrf.mxu0
        %v2043 = vpop.f32.mrf.mxu0
        %v2044 = vadd.f32 %v1979, %v2043
        %v2045 = vpop.f32.mrf.mxu0
        %2046 = vmatprep.mubr.bf16.mxu0 %v1017
        %2047 = vmatmul.mubr.bf16.gmra.mxu0 %v1016
        %v2048 = vpop.f32.mrf.mxu0
        %v2049 = vadd.f32 %v1984, %v2048
        %v2050 = vpop.f32.mrf.mxu0
        %v2051 = vpop.f32.mrf.mxu0
        %v2052 = vadd.f32 %v1987, %v2051
        %v2053 = vpop.f32.mrf.mxu0
        %2054 = vdwg.mxu0
        %2055 = vmatprep.subr.bf16.mxu0 0
        %2056 = vmatpush1.bf16.msra.mxu0 %v1659
        %2057 = vmatprep.subr.bf16.mxu0 0
        %2058 = vmatpush1.bf16.msra.mxu0 %v1658
        %2059 = vmatprep.subr.bf16.mxu0 0
        %2060 = vmatpush1.bf16.msra.mxu0 %v1657
        %2061 = vmatprep.subr.bf16.mxu0 0
        %2062 = vmatpush1.bf16.msra.mxu0 %v1656
        %2063 = vmatprep.subr.bf16.mxu0 0
        %2064 = vmatpush1.bf16.msra.mxu0 %v1655
        %2065 = vmatprep.subr.bf16.mxu0 0
        %2066 = vmatpush1.bf16.msra.mxu0 %v1654
        %2067 = vmatprep.subr.bf16.mxu0 0
        %2068 = vmatpush1.bf16.msra.mxu0 %v1653
        %2069 = vmatprep.subr.bf16.mxu0 0
        %2070 = vmatpush1.bf16.msra.mxu0 %v1652
        %2071 = vmatprep.subr.bf16.mxu0 0
        %2072 = vmatpush2.bf16.msra.mxu0 %v1667
        %2073 = vmatprep.subr.bf16.mxu0 0
        %2074 = vmatpush2.bf16.msra.mxu0 %v1666
        %2075 = vmatprep.subr.bf16.mxu0 0
        %2076 = vmatpush2.bf16.msra.mxu0 %v1665
        %2077 = vmatprep.subr.bf16.mxu0 0
        %2078 = vmatpush2.bf16.msra.mxu0 %v1664
        %2079 = vmatprep.subr.bf16.mxu0 0
        %2080 = vmatpush2.bf16.msra.mxu0 %v1663
        %2081 = vmatprep.subr.bf16.mxu0 0
        %2082 = vmatpush2.bf16.msra.mxu0 %v1662
        %2083 = vmatprep.subr.bf16.mxu0 0
        %2084 = vmatpush2.bf16.msra.mxu0 %v1661
        %2085 = vmatprep.subr.bf16.mxu0 0
        %2086 = vmatpush2.bf16.msra.mxu0 %v1660
        %2087 = vmatprep.mubr.bf16.mxu0 %v971
        %2088 = vmatmul.mubr.bf16.gmra.mxu0 %v970
        %v2089 = vpop.f32.mrf.mxu0
        %v2090 = vadd.f32 %v2025, %v2089
        %v2091 = vpop.f32.mrf.mxu0
        %v2092 = vpop.f32.mrf.mxu0
        %v2093 = vadd.f32 %v2028, %v2092
        %v2094 = vpop.f32.mrf.mxu0
        %2095 = vmatprep.mubr.bf16.mxu0 %v987
        %2096 = vmatmul.mubr.bf16.gmra.mxu0 %v986
        %v2097 = vpop.f32.mrf.mxu0
        %v2098 = vadd.f32 %v2033, %v2097
        %v2099 = vpop.f32.mrf.mxu0
        %v2100 = vpop.f32.mrf.mxu0
        %v2101 = vadd.f32 %v2036, %v2100
        %v2102 = vpop.f32.mrf.mxu0
        %2103 = vmatprep.mubr.bf16.mxu0 %v1003
        %2104 = vmatmul.mubr.bf16.gmra.mxu0 %v1002
        %v2105 = vpop.f32.mrf.mxu0
        %v2106 = vadd.f32 %v2041, %v2105
        %v2107 = vpop.f32.mrf.mxu0
        %v2108 = vpop.f32.mrf.mxu0
        %v2109 = vadd.f32 %v2044, %v2108
        %v2110 = vpop.f32.mrf.mxu0
        %2111 = vmatprep.mubr.bf16.mxu0 %v1019
        %2112 = vmatmul.mubr.bf16.gmra.mxu0 %v1018
        %v2113 = vpop.f32.mrf.mxu0
        %v2114 = vadd.f32 %v2049, %v2113
        %v2115 = vpop.f32.mrf.mxu0
        %v2116 = vpop.f32.mrf.mxu0
        %v2117 = vadd.f32 %v2052, %v2116
        %v2118 = vpop.f32.mrf.mxu0
        %2119 = vdwg.mxu0
        %2120 = vmatprep.subr.bf16.mxu0 0
        %2121 = vmatpush1.bf16.msra.mxu0 %v1675
        %2122 = vmatprep.subr.bf16.mxu0 0
        %2123 = vmatpush1.bf16.msra.mxu0 %v1674
        %2124 = vmatprep.subr.bf16.mxu0 0
        %2125 = vmatpush1.bf16.msra.mxu0 %v1673
        %2126 = vmatprep.subr.bf16.mxu0 0
        %2127 = vmatpush1.bf16.msra.mxu0 %v1672
        %2128 = vmatprep.subr.bf16.mxu0 0
        %2129 = vmatpush1.bf16.msra.mxu0 %v1671
        %2130 = vmatprep.subr.bf16.mxu0 0
        %2131 = vmatpush1.bf16.msra.mxu0 %v1670
        %2132 = vmatprep.subr.bf16.mxu0 0
        %2133 = vmatpush1.bf16.msra.mxu0 %v1669
        %2134 = vmatprep.subr.bf16.mxu0 0
        %2135 = vmatpush1.bf16.msra.mxu0 %v1668
        %2136 = vmatprep.subr.bf16.mxu0 0
        %2137 = vmatpush2.bf16.msra.mxu0 %v1683
        %2138 = vmatprep.subr.bf16.mxu0 0
        %2139 = vmatpush2.bf16.msra.mxu0 %v1682
        %2140 = vmatprep.subr.bf16.mxu0 0
        %2141 = vmatpush2.bf16.msra.mxu0 %v1681
        %2142 = vmatprep.subr.bf16.mxu0 0
        %2143 = vmatpush2.bf16.msra.mxu0 %v1680
        %2144 = vmatprep.subr.bf16.mxu0 0
        %2145 = vmatpush2.bf16.msra.mxu0 %v1679
        %2146 = vmatprep.subr.bf16.mxu0 0
        %2147 = vmatpush2.bf16.msra.mxu0 %v1678
        %2148 = vmatprep.subr.bf16.mxu0 0
        %2149 = vmatpush2.bf16.msra.mxu0 %v1677
        %2150 = vmatprep.subr.bf16.mxu0 0
        %2151 = vmatpush2.bf16.msra.mxu0 %v1676
        %2152 = vmatprep.mubr.bf16.mxu0 %v973
        %2153 = vmatmul.mubr.bf16.gmra.mxu0 %v972
        %v2154 = vpop.f32.mrf.mxu0
        %v2155 = vadd.f32 %v2090, %v2154
        %v2156 = vpop.f32.mrf.mxu0
        %v2157 = vpop.f32.mrf.mxu0
        %v2158 = vadd.f32 %v2093, %v2157
        %v2159 = vpop.f32.mrf.mxu0
        %2160 = vmatprep.mubr.bf16.mxu0 %v989
        %2161 = vmatmul.mubr.bf16.gmra.mxu0 %v988
        %v2162 = vpop.f32.mrf.mxu0
        %v2163 = vadd.f32 %v2098, %v2162
        %v2164 = vpop.f32.mrf.mxu0
        %v2165 = vpop.f32.mrf.mxu0
        %v2166 = vadd.f32 %v2101, %v2165
        %v2167 = vpop.f32.mrf.mxu0
        %2168 = vmatprep.mubr.bf16.mxu0 %v1005
        %2169 = vmatmul.mubr.bf16.gmra.mxu0 %v1004
        %v2170 = vpop.f32.mrf.mxu0
        %v2171 = vadd.f32 %v2106, %v2170
        %v2172 = vpop.f32.mrf.mxu0
        %v2173 = vpop.f32.mrf.mxu0
        %v2174 = vadd.f32 %v2109, %v2173
        %v2175 = vpop.f32.mrf.mxu0
        %2176 = vmatprep.mubr.bf16.mxu0 %v1021
        %2177 = vmatmul.mubr.bf16.gmra.mxu0 %v1020
        %v2178 = vpop.f32.mrf.mxu0
        %v2179 = vadd.f32 %v2114, %v2178
        %v2180 = vpop.f32.mrf.mxu0
        %v2181 = vpop.f32.mrf.mxu0
        %v2182 = vadd.f32 %v2117, %v2181
        %v2183 = vpop.f32.mrf.mxu0
        %2184 = vdwg.mxu0
        %2185 = vmatprep.subr.bf16.mxu0 0
        %2186 = vmatpush1.bf16.msra.mxu0 %v1691
        %2187 = vmatprep.subr.bf16.mxu0 0
        %2188 = vmatpush1.bf16.msra.mxu0 %v1690
        %2189 = vmatprep.subr.bf16.mxu0 0
        %2190 = vmatpush1.bf16.msra.mxu0 %v1689
        %2191 = vmatprep.subr.bf16.mxu0 0
        %2192 = vmatpush1.bf16.msra.mxu0 %v1688
        %2193 = vmatprep.subr.bf16.mxu0 0
        %2194 = vmatpush1.bf16.msra.mxu0 %v1687
        %2195 = vmatprep.subr.bf16.mxu0 0
        %2196 = vmatpush1.bf16.msra.mxu0 %v1686
        %2197 = vmatprep.subr.bf16.mxu0 0
        %2198 = vmatpush1.bf16.msra.mxu0 %v1685
        %2199 = vmatprep.subr.bf16.mxu0 0
        %2200 = vmatpush1.bf16.msra.mxu0 %v1684
        %2201 = vmatprep.subr.bf16.mxu0 0
        %2202 = vmatpush2.bf16.msra.mxu0 %v1699
        %2203 = vmatprep.subr.bf16.mxu0 0
        %2204 = vmatpush2.bf16.msra.mxu0 %v1698
        %2205 = vmatprep.subr.bf16.mxu0 0
        %2206 = vmatpush2.bf16.msra.mxu0 %v1697
        %2207 = vmatprep.subr.bf16.mxu0 0
        %2208 = vmatpush2.bf16.msra.mxu0 %v1696
        %2209 = vmatprep.subr.bf16.mxu0 0
        %2210 = vmatpush2.bf16.msra.mxu0 %v1695
        %2211 = vmatprep.subr.bf16.mxu0 0
        %2212 = vmatpush2.bf16.msra.mxu0 %v1694
        %2213 = vmatprep.subr.bf16.mxu0 0
        %2214 = vmatpush2.bf16.msra.mxu0 %v1693
        %2215 = vmatprep.subr.bf16.mxu0 0
        %2216 = vmatpush2.bf16.msra.mxu0 %v1692
        %2217 = vmatprep.mubr.bf16.mxu0 %v975
        %2218 = vmatmul.mubr.bf16.gmra.mxu0 %v974
        %v2219 = vpop.f32.mrf.mxu0
        %v2220 = vadd.f32 %v2155, %v2219
        %v2221 = vpop.f32.mrf.mxu0
        %v2222 = vpop.f32.mrf.mxu0
        %v2223 = vadd.f32 %v2158, %v2222
        %v2224 = vpop.f32.mrf.mxu0
        %2225 = vmatprep.mubr.bf16.mxu0 %v991
        %2226 = vmatmul.mubr.bf16.gmra.mxu0 %v990
        %v2227 = vpop.f32.mrf.mxu0
        %v2228 = vadd.f32 %v2163, %v2227
        %v2229 = vpop.f32.mrf.mxu0
        %v2230 = vpop.f32.mrf.mxu0
        %v2231 = vadd.f32 %v2166, %v2230
        %v2232 = vpop.f32.mrf.mxu0
        %2233 = vmatprep.mubr.bf16.mxu0 %v1007
        %2234 = vmatmul.mubr.bf16.gmra.mxu0 %v1006
        %v2235 = vpop.f32.mrf.mxu0
        %v2236 = vadd.f32 %v2171, %v2235
        %v2237 = vpop.f32.mrf.mxu0
        %v2238 = vpop.f32.mrf.mxu0
        %v2239 = vadd.f32 %v2174, %v2238
        %v2240 = vpop.f32.mrf.mxu0
        %2241 = vmatprep.mubr.bf16.mxu0 %v1023
        %2242 = vmatmul.mubr.bf16.gmra.mxu0 %v1022
        %v2243 = vpop.f32.mrf.mxu0
        %v2244 = vadd.f32 %v2179, %v2243
        %v2245 = vpop.f32.mrf.mxu0
        %v2246 = vpop.f32.mrf.mxu0
        %v2247 = vadd.f32 %v2182, %v2246
        %v2248 = vpop.f32.mrf.mxu0
        %2249 = vdwg.mxu0
        %2250 = vmatprep.subr.bf16.mxu0 0
        %2251 = vmatpush1.bf16.msra.mxu0 %v1707
        %2252 = vmatprep.subr.bf16.mxu0 0
        %2253 = vmatpush1.bf16.msra.mxu0 %v1706
        %2254 = vmatprep.subr.bf16.mxu0 0
        %2255 = vmatpush1.bf16.msra.mxu0 %v1705
        %2256 = vmatprep.subr.bf16.mxu0 0
        %2257 = vmatpush1.bf16.msra.mxu0 %v1704
        %2258 = vmatprep.subr.bf16.mxu0 0
        %2259 = vmatpush1.bf16.msra.mxu0 %v1703
        %2260 = vmatprep.subr.bf16.mxu0 0
        %2261 = vmatpush1.bf16.msra.mxu0 %v1702
        %2262 = vmatprep.subr.bf16.mxu0 0
        %2263 = vmatpush1.bf16.msra.mxu0 %v1701
        %2264 = vmatprep.subr.bf16.mxu0 0
        %2265 = vmatpush1.bf16.msra.mxu0 %v1700
        %2266 = vmatprep.subr.bf16.mxu0 0
        %2267 = vmatpush2.bf16.msra.mxu0 %v1715
        %2268 = vmatprep.subr.bf16.mxu0 0
        %2269 = vmatpush2.bf16.msra.mxu0 %v1714
        %2270 = vmatprep.subr.bf16.mxu0 0
        %2271 = vmatpush2.bf16.msra.mxu0 %v1713
        %2272 = vmatprep.subr.bf16.mxu0 0
        %2273 = vmatpush2.bf16.msra.mxu0 %v1712
        %2274 = vmatprep.subr.bf16.mxu0 0
        %2275 = vmatpush2.bf16.msra.mxu0 %v1711
        %2276 = vmatprep.subr.bf16.mxu0 0
        %2277 = vmatpush2.bf16.msra.mxu0 %v1710
        %2278 = vmatprep.subr.bf16.mxu0 0
        %2279 = vmatpush2.bf16.msra.mxu0 %v1709
        %2280 = vmatprep.subr.bf16.mxu0 0
        %2281 = vmatpush2.bf16.msra.mxu0 %v1708
        %2282 = vmatprep.mubr.bf16.mxu0 %v977
        %2283 = vmatmul.mubr.bf16.gmra.mxu0 %v976
        %v2284 = vpop.f32.mrf.mxu0
        %v2285 = vadd.f32 %v2220, %v2284
        %v2286 = vpop.f32.mrf.mxu0
        %v2287 = vpop.f32.mrf.mxu0
        %v2288 = vadd.f32 %v2223, %v2287
        %v2289 = vpop.f32.mrf.mxu0
        %2290 = vmatprep.mubr.bf16.mxu0 %v993
        %2291 = vmatmul.mubr.bf16.gmra.mxu0 %v992
        %v2292 = vpop.f32.mrf.mxu0
        %v2293 = vadd.f32 %v2228, %v2292
        %v2294 = vpop.f32.mrf.mxu0
        %v2295 = vpop.f32.mrf.mxu0
        %v2296 = vadd.f32 %v2231, %v2295
        %v2297 = vpop.f32.mrf.mxu0
        %2298 = vmatprep.mubr.bf16.mxu0 %v1009
        %2299 = vmatmul.mubr.bf16.gmra.mxu0 %v1008
        %v2300 = vpop.f32.mrf.mxu0
        %v2301 = vadd.f32 %v2236, %v2300
        %v2302 = vpop.f32.mrf.mxu0
        %v2303 = vpop.f32.mrf.mxu0
        %v2304 = vadd.f32 %v2239, %v2303
        %v2305 = vpop.f32.mrf.mxu0
        %2306 = vmatprep.mubr.bf16.mxu0 %v1025
        %2307 = vmatmul.mubr.bf16.gmra.mxu0 %v1024
        %v2308 = vpop.f32.mrf.mxu0
        %v2309 = vadd.f32 %v2244, %v2308
        %v2310 = vpop.f32.mrf.mxu0
        %v2311 = vpop.f32.mrf.mxu0
        %v2312 = vadd.f32 %v2247, %v2311
        %v2313 = vpop.f32.mrf.mxu0
        %2314 = vdwg.mxu0
        %2315 = vmatprep.subr.bf16.mxu0 0
        %2316 = vmatpush1.bf16.msra.mxu0 %v1723
        %2317 = vmatprep.subr.bf16.mxu0 0
        %2318 = vmatpush1.bf16.msra.mxu0 %v1722
        %2319 = vmatprep.subr.bf16.mxu0 0
        %2320 = vmatpush1.bf16.msra.mxu0 %v1721
        %2321 = vmatprep.subr.bf16.mxu0 0
        %2322 = vmatpush1.bf16.msra.mxu0 %v1720
        %2323 = vmatprep.subr.bf16.mxu0 0
        %2324 = vmatpush1.bf16.msra.mxu0 %v1719
        %2325 = vmatprep.subr.bf16.mxu0 0
        %2326 = vmatpush1.bf16.msra.mxu0 %v1718
        %2327 = vmatprep.subr.bf16.mxu0 0
        %2328 = vmatpush1.bf16.msra.mxu0 %v1717
        %2329 = vmatprep.subr.bf16.mxu0 0
        %2330 = vmatpush1.bf16.msra.mxu0 %v1716
        %2331 = vmatprep.subr.bf16.mxu0 0
        %2332 = vmatpush2.bf16.msra.mxu0 %v1731
        %2333 = vmatprep.subr.bf16.mxu0 0
        %2334 = vmatpush2.bf16.msra.mxu0 %v1730
        %2335 = vmatprep.subr.bf16.mxu0 0
        %2336 = vmatpush2.bf16.msra.mxu0 %v1729
        %2337 = vmatprep.subr.bf16.mxu0 0
        %2338 = vmatpush2.bf16.msra.mxu0 %v1728
        %2339 = vmatprep.subr.bf16.mxu0 0
        %2340 = vmatpush2.bf16.msra.mxu0 %v1727
        %2341 = vmatprep.subr.bf16.mxu0 0
        %2342 = vmatpush2.bf16.msra.mxu0 %v1726
        %2343 = vmatprep.subr.bf16.mxu0 0
        %2344 = vmatpush2.bf16.msra.mxu0 %v1725
        %2345 = vmatprep.subr.bf16.mxu0 0
        %2346 = vmatpush2.bf16.msra.mxu0 %v1724
        %2347 = vmatprep.mubr.bf16.mxu0 %v979
        %2348 = vmatmul.mubr.bf16.gmra.mxu0 %v978
        %v2349 = vpop.f32.mrf.mxu0
        %v2350 = vadd.f32 %v2285, %v2349
        %v2351 = vpop.f32.mrf.mxu0
        %v2352 = vpop.f32.mrf.mxu0
        %v2353 = vadd.f32 %v2288, %v2352
        %v2354 = vpop.f32.mrf.mxu0
        %2355 = vmatprep.mubr.bf16.mxu0 %v995
        %2356 = vmatmul.mubr.bf16.gmra.mxu0 %v994
        %v2357 = vpop.f32.mrf.mxu0
        %v2358 = vadd.f32 %v2293, %v2357
        %v2359 = vpop.f32.mrf.mxu0
        %v2360 = vpop.f32.mrf.mxu0
        %v2361 = vadd.f32 %v2296, %v2360
        %v2362 = vpop.f32.mrf.mxu0
        %2363 = vmatprep.mubr.bf16.mxu0 %v1011
        %2364 = vmatmul.mubr.bf16.gmra.mxu0 %v1010
        %v2365 = vpop.f32.mrf.mxu0
        %v2366 = vadd.f32 %v2301, %v2365
        %v2367 = vpop.f32.mrf.mxu0
        %v2368 = vpop.f32.mrf.mxu0
        %v2369 = vadd.f32 %v2304, %v2368
        %v2370 = vpop.f32.mrf.mxu0
        %2371 = vmatprep.mubr.bf16.mxu0 %v1027
        %2372 = vmatmul.mubr.bf16.gmra.mxu0 %v1026
        %v2373 = vpop.f32.mrf.mxu0
        %v2374 = vadd.f32 %v2309, %v2373
        %v2375 = vpop.f32.mrf.mxu0
        %v2376 = vpop.f32.mrf.mxu0
        %v2377 = vadd.f32 %v2312, %v2376
        %v2378 = vpop.f32.mrf.mxu0
        %2379 = vdwg.mxu0
        %v2636 = vunpack.c.l.b16 %v260
        %v2637 = vunpack.c.l.b16 %v261
        %v2638 = vunpack.c.l.b16 %v262
        %v2639 = vunpack.c.l.b16 %v263
        %v2640 = vunpack.c.l.b16 %v264
        %v2641 = vunpack.c.l.b16 %v265
        %v2642 = vunpack.c.l.b16 %v266
        %v2643 = vunpack.c.l.b16 %v267
        %v2644 = vunpack.c.l.b16 %v268
        %v2645 = vunpack.c.l.b16 %v269
        %v2646 = vunpack.c.l.b16 %v270
        %v2647 = vunpack.c.l.b16 %v271
        %v2648 = vunpack.c.l.b16 %v272
        %v2649 = vunpack.c.l.b16 %v273
        %v2650 = vunpack.c.l.b16 %v274
        %v2651 = vunpack.c.l.b16 %v275
        %v2652 = vunpack.c.l.b16 %v276
        %v2653 = vunpack.c.l.b16 %v277
        %v2654 = vunpack.c.l.b16 %v278
        %v2655 = vunpack.c.l.b16 %v279
        %v2656 = vunpack.c.l.b16 %v280
        %v2657 = vunpack.c.l.b16 %v281
        %v2658 = vunpack.c.l.b16 %v282
        %v2659 = vunpack.c.l.b16 %v283
        %v2660 = vunpack.c.l.b16 %v284
        %v2661 = vunpack.c.l.b16 %v285
        %v2662 = vunpack.c.l.b16 %v286
        %v2663 = vunpack.c.l.b16 %v287
        %v2664 = vunpack.c.l.b16 %v288
        %v2665 = vunpack.c.l.b16 %v289
        %v2666 = vunpack.c.l.b16 %v290
        %v2667 = vunpack.c.l.b16 %v291
        %v2668 = vunpack.c.l.b16 %v292
        %v2669 = vunpack.c.l.b16 %v293
        %v2670 = vunpack.c.l.b16 %v294
        %v2671 = vunpack.c.l.b16 %v295
        %v2672 = vunpack.c.l.b16 %v296
        %v2673 = vunpack.c.l.b16 %v297
        %v2674 = vunpack.c.l.b16 %v298
        %v2675 = vunpack.c.l.b16 %v299
        %v2676 = vunpack.c.l.b16 %v300
        %v2677 = vunpack.c.l.b16 %v301
        %v2678 = vunpack.c.l.b16 %v302
        %v2679 = vunpack.c.l.b16 %v303
        %v2680 = vunpack.c.l.b16 %v304
        %v2681 = vunpack.c.l.b16 %v305
        %v2682 = vunpack.c.l.b16 %v306
        %v2683 = vunpack.c.l.b16 %v307
        %v2684 = vunpack.c.l.b16 %v308
        %v2685 = vunpack.c.l.b16 %v309
        %v2686 = vunpack.c.l.b16 %v310
        %v2687 = vunpack.c.l.b16 %v311
        %v2688 = vunpack.c.l.b16 %v312
        %v2689 = vunpack.c.l.b16 %v313
        %v2690 = vunpack.c.l.b16 %v314
        %v2691 = vunpack.c.l.b16 %v315
        %v2692 = vunpack.c.l.b16 %v316
        %v2693 = vunpack.c.l.b16 %v317
        %v2694 = vunpack.c.l.b16 %v318
        %v2695 = vunpack.c.l.b16 %v319
        %v2696 = vunpack.c.l.b16 %v320
        %v2697 = vunpack.c.l.b16 %v321
        %v2698 = vunpack.c.l.b16 %v322
        %v2699 = vunpack.c.l.b16 %v323
        %v2700 = vunpack.c.l.b16 %v324
        %v2701 = vunpack.c.l.b16 %v325
        %v2702 = vunpack.c.l.b16 %v326
        %v2703 = vunpack.c.l.b16 %v327
        %v2704 = vunpack.c.l.b16 %v328
        %v2705 = vunpack.c.l.b16 %v329
        %v2706 = vunpack.c.l.b16 %v330
        %v2707 = vunpack.c.l.b16 %v331
        %v2708 = vunpack.c.l.b16 %v332
        %v2709 = vunpack.c.l.b16 %v333
        %v2710 = vunpack.c.l.b16 %v334
        %v2711 = vunpack.c.l.b16 %v335
        %v2712 = vunpack.c.l.b16 %v336
        %v2713 = vunpack.c.l.b16 %v337
        %v2714 = vunpack.c.l.b16 %v338
        %v2715 = vunpack.c.l.b16 %v339
        %v2716 = vunpack.c.l.b16 %v340
        %v2717 = vunpack.c.l.b16 %v341
        %v2718 = vunpack.c.l.b16 %v342
        %v2719 = vunpack.c.l.b16 %v343
        %v2720 = vunpack.c.l.b16 %v344
        %v2721 = vunpack.c.l.b16 %v345
        %v2722 = vunpack.c.l.b16 %v346
        %v2723 = vunpack.c.l.b16 %v347
        %v2724 = vunpack.c.l.b16 %v348
        %v2725 = vunpack.c.l.b16 %v349
        %v2726 = vunpack.c.l.b16 %v350
        %v2727 = vunpack.c.l.b16 %v351
        %v2728 = vunpack.c.l.b16 %v352
        %v2729 = vunpack.c.l.b16 %v353
        %v2730 = vunpack.c.l.b16 %v354
        %v2731 = vunpack.c.l.b16 %v355
        %v2732 = vunpack.c.l.b16 %v356
        %v2733 = vunpack.c.l.b16 %v357
        %v2734 = vunpack.c.l.b16 %v358
        %v2735 = vunpack.c.l.b16 %v359
        %v2736 = vunpack.c.l.b16 %v360
        %v2737 = vunpack.c.l.b16 %v361
        %v2738 = vunpack.c.l.b16 %v362
        %v2739 = vunpack.c.l.b16 %v363
        %v2740 = vunpack.c.l.b16 %v364
        %v2741 = vunpack.c.l.b16 %v365
        %v2742 = vunpack.c.l.b16 %v366
        %v2743 = vunpack.c.l.b16 %v367
        %v2744 = vunpack.c.l.b16 %v368
        %v2745 = vunpack.c.l.b16 %v369
        %v2746 = vunpack.c.l.b16 %v370
        %v2747 = vunpack.c.l.b16 %v371
        %v2748 = vunpack.c.l.b16 %v372
        %v2749 = vunpack.c.l.b16 %v373
        %v2750 = vunpack.c.l.b16 %v374
        %v2751 = vunpack.c.l.b16 %v375
        %v2752 = vunpack.c.l.b16 %v376
        %v2753 = vunpack.c.l.b16 %v377
        %v2754 = vunpack.c.l.b16 %v378
        %v2755 = vunpack.c.l.b16 %v379
        %v2756 = vunpack.c.l.b16 %v380
        %v2757 = vunpack.c.l.b16 %v381
        %v2758 = vunpack.c.l.b16 %v382
        %v2759 = vunpack.c.l.b16 %v383
        %v2760 = vunpack.c.l.b16 %v384
        %v2761 = vunpack.c.l.b16 %v385
        %v2762 = vunpack.c.l.b16 %v386
        %v2763 = vunpack.c.l.b16 %v387
        %v2764 = vunpack.c.l.b16 %v388
        %v2765 = vunpack.c.l.b16 %v389
        %v2766 = vunpack.c.l.b16 %v390
        %v2767 = vunpack.c.l.b16 %v391
        %v2768 = vunpack.c.l.b16 %v392
        %v2769 = vunpack.c.l.b16 %v393
        %v2770 = vunpack.c.l.b16 %v394
        %v2771 = vunpack.c.l.b16 %v395
        %v2772 = vunpack.c.l.b16 %v396
        %v2773 = vunpack.c.l.b16 %v397
        %v2774 = vunpack.c.l.b16 %v398
        %v2775 = vunpack.c.l.b16 %v399
        %v2776 = vunpack.c.l.b16 %v400
        %v2777 = vunpack.c.l.b16 %v401
        %v2778 = vunpack.c.l.b16 %v402
        %v2779 = vunpack.c.l.b16 %v403
        %v2780 = vunpack.c.l.b16 %v404
        %v2781 = vunpack.c.l.b16 %v405
        %v2782 = vunpack.c.l.b16 %v406
        %v2783 = vunpack.c.l.b16 %v407
        %v2784 = vunpack.c.l.b16 %v408
        %v2785 = vunpack.c.l.b16 %v409
        %v2786 = vunpack.c.l.b16 %v410
        %v2787 = vunpack.c.l.b16 %v411
        %v2788 = vunpack.c.l.b16 %v412
        %v2789 = vunpack.c.l.b16 %v413
        %v2790 = vunpack.c.l.b16 %v414
        %v2791 = vunpack.c.l.b16 %v415
        %v2792 = vunpack.c.l.b16 %v416
        %v2793 = vunpack.c.l.b16 %v417
        %v2794 = vunpack.c.l.b16 %v418
        %v2795 = vunpack.c.l.b16 %v419
        %v2796 = vunpack.c.l.b16 %v420
        %v2797 = vunpack.c.l.b16 %v421
        %v2798 = vunpack.c.l.b16 %v422
        %v2799 = vunpack.c.l.b16 %v423
        %v2800 = vunpack.c.l.b16 %v424
        %v2801 = vunpack.c.l.b16 %v425
        %v2802 = vunpack.c.l.b16 %v426
        %v2803 = vunpack.c.l.b16 %v427
        %v2804 = vunpack.c.l.b16 %v428
        %v2805 = vunpack.c.l.b16 %v429
        %v2806 = vunpack.c.l.b16 %v430
        %v2807 = vunpack.c.l.b16 %v431
        %v2808 = vunpack.c.l.b16 %v432
        %v2809 = vunpack.c.l.b16 %v433
        %v2810 = vunpack.c.l.b16 %v434
        %v2811 = vunpack.c.l.b16 %v435
        %v2812 = vunpack.c.l.b16 %v436
        %v2813 = vunpack.c.l.b16 %v437
        %v2814 = vunpack.c.l.b16 %v438
        %v2815 = vunpack.c.l.b16 %v439
        %v2816 = vunpack.c.l.b16 %v440
        %v2817 = vunpack.c.l.b16 %v441
        %v2818 = vunpack.c.l.b16 %v442
        %v2819 = vunpack.c.l.b16 %v443
        %v2820 = vunpack.c.l.b16 %v444
        %v2821 = vunpack.c.l.b16 %v445
        %v2822 = vunpack.c.l.b16 %v446
        %v2823 = vunpack.c.l.b16 %v447
        %v2824 = vunpack.c.l.b16 %v448
        %v2825 = vunpack.c.l.b16 %v449
        %v2826 = vunpack.c.l.b16 %v450
        %v2827 = vunpack.c.l.b16 %v451
        %v2828 = vunpack.c.l.b16 %v452
        %v2829 = vunpack.c.l.b16 %v453
        %v2830 = vunpack.c.l.b16 %v454
        %v2831 = vunpack.c.l.b16 %v455
        %v2832 = vunpack.c.l.b16 %v456
        %v2833 = vunpack.c.l.b16 %v457
        %v2834 = vunpack.c.l.b16 %v458
        %v2835 = vunpack.c.l.b16 %v459
        %v2836 = vunpack.c.l.b16 %v460
        %v2837 = vunpack.c.l.b16 %v461
        %v2838 = vunpack.c.l.b16 %v462
        %v2839 = vunpack.c.l.b16 %v463
        %v2840 = vunpack.c.l.b16 %v464
        %v2841 = vunpack.c.l.b16 %v465
        %v2842 = vunpack.c.l.b16 %v466
        %v2843 = vunpack.c.l.b16 %v467
        %v2844 = vunpack.c.l.b16 %v468
        %v2845 = vunpack.c.l.b16 %v469
        %v2846 = vunpack.c.l.b16 %v470
        %v2847 = vunpack.c.l.b16 %v471
        %v2848 = vunpack.c.l.b16 %v472
        %v2849 = vunpack.c.l.b16 %v473
        %v2850 = vunpack.c.l.b16 %v474
        %v2851 = vunpack.c.l.b16 %v475
        %v2852 = vunpack.c.l.b16 %v476
        %v2853 = vunpack.c.l.b16 %v477
        %v2854 = vunpack.c.l.b16 %v478
        %v2855 = vunpack.c.l.b16 %v479
        %v2856 = vunpack.c.l.b16 %v480
        %v2857 = vunpack.c.l.b16 %v481
        %v2858 = vunpack.c.l.b16 %v482
        %v2859 = vunpack.c.l.b16 %v483
        %v2860 = vunpack.c.l.b16 %v484
        %v2861 = vunpack.c.l.b16 %v485
        %v2862 = vunpack.c.l.b16 %v486
        %v2863 = vunpack.c.l.b16 %v487
        %v2864 = vunpack.c.l.b16 %v488
        %v2865 = vunpack.c.l.b16 %v489
        %v2866 = vunpack.c.l.b16 %v490
        %v2867 = vunpack.c.l.b16 %v491
        %v2868 = vunpack.c.l.b16 %v492
        %v2869 = vunpack.c.l.b16 %v493
        %v2870 = vunpack.c.l.b16 %v494
        %v2871 = vunpack.c.l.b16 %v495
        %v2872 = vunpack.c.l.b16 %v496
        %v2873 = vunpack.c.l.b16 %v497
        %v2874 = vunpack.c.l.b16 %v498
        %v2875 = vunpack.c.l.b16 %v499
        %v2876 = vunpack.c.l.b16 %v500
        %v2877 = vunpack.c.l.b16 %v501
        %v2878 = vunpack.c.l.b16 %v502
        %v2879 = vunpack.c.l.b16 %v503
        %v2880 = vunpack.c.l.b16 %v504
        %v2881 = vunpack.c.l.b16 %v505
        %v2882 = vunpack.c.l.b16 %v506
        %v2883 = vunpack.c.l.b16 %v507
        %v2884 = vunpack.c.l.b16 %v508
        %v2885 = vunpack.c.l.b16 %v509
        %v2886 = vunpack.c.l.b16 %v510
        %v2887 = vunpack.c.l.b16 %v511
        %v2888 = vunpack.c.l.b16 %v512
        %v2889 = vunpack.c.l.b16 %v513
        %v2890 = vunpack.c.l.b16 %v514
        %v2891 = vunpack.c.l.b16 %v515
        %v2892 = vpack.c.b16 %v2637, %v2636
        %v2893 = vpack.c.b16 %v2639, %v2638
        %v2894 = vpack.c.b16 %v2641, %v2640
        %v2895 = vpack.c.b16 %v2643, %v2642
        %v2896 = vpack.c.b16 %v2645, %v2644
        %v2897 = vpack.c.b16 %v2647, %v2646
        %v2898 = vpack.c.b16 %v2649, %v2648
        %v2899 = vpack.c.b16 %v2651, %v2650
        %v2900 = vpack.c.b16 %v2653, %v2652
        %v2901 = vpack.c.b16 %v2655, %v2654
        %v2902 = vpack.c.b16 %v2657, %v2656
        %v2903 = vpack.c.b16 %v2659, %v2658
        %v2904 = vpack.c.b16 %v2661, %v2660
        %v2905 = vpack.c.b16 %v2663, %v2662
        %v2906 = vpack.c.b16 %v2665, %v2664
        %v2907 = vpack.c.b16 %v2667, %v2666
        %v2908 = vpack.c.b16 %v2669, %v2668
        %v2909 = vpack.c.b16 %v2671, %v2670
        %v2910 = vpack.c.b16 %v2673, %v2672
        %v2911 = vpack.c.b16 %v2675, %v2674
        %v2912 = vpack.c.b16 %v2677, %v2676
        %v2913 = vpack.c.b16 %v2679, %v2678
        %v2914 = vpack.c.b16 %v2681, %v2680
        %v2915 = vpack.c.b16 %v2683, %v2682
        %v2916 = vpack.c.b16 %v2685, %v2684
        %v2917 = vpack.c.b16 %v2687, %v2686
        %v2918 = vpack.c.b16 %v2689, %v2688
        %v2919 = vpack.c.b16 %v2691, %v2690
        %v2920 = vpack.c.b16 %v2693, %v2692
        %v2921 = vpack.c.b16 %v2695, %v2694
        %v2922 = vpack.c.b16 %v2697, %v2696
        %v2923 = vpack.c.b16 %v2699, %v2698
        %v2924 = vpack.c.b16 %v2701, %v2700
        %v2925 = vpack.c.b16 %v2703, %v2702
        %v2926 = vpack.c.b16 %v2705, %v2704
        %v2927 = vpack.c.b16 %v2707, %v2706
        %v2928 = vpack.c.b16 %v2709, %v2708
        %v2929 = vpack.c.b16 %v2711, %v2710
        %v2930 = vpack.c.b16 %v2713, %v2712
        %v2931 = vpack.c.b16 %v2715, %v2714
        %v2932 = vpack.c.b16 %v2717, %v2716
        %v2933 = vpack.c.b16 %v2719, %v2718
        %v2934 = vpack.c.b16 %v2721, %v2720
        %v2935 = vpack.c.b16 %v2723, %v2722
        %v2936 = vpack.c.b16 %v2725, %v2724
        %v2937 = vpack.c.b16 %v2727, %v2726
        %v2938 = vpack.c.b16 %v2729, %v2728
        %v2939 = vpack.c.b16 %v2731, %v2730
        %v2940 = vpack.c.b16 %v2733, %v2732
        %v2941 = vpack.c.b16 %v2735, %v2734
        %v2942 = vpack.c.b16 %v2737, %v2736
        %v2943 = vpack.c.b16 %v2739, %v2738
        %v2944 = vpack.c.b16 %v2741, %v2740
        %v2945 = vpack.c.b16 %v2743, %v2742
        %v2946 = vpack.c.b16 %v2745, %v2744
        %v2947 = vpack.c.b16 %v2747, %v2746
        %v2948 = vpack.c.b16 %v2749, %v2748
        %v2949 = vpack.c.b16 %v2751, %v2750
        %v2950 = vpack.c.b16 %v2753, %v2752
        %v2951 = vpack.c.b16 %v2755, %v2754
        %v2952 = vpack.c.b16 %v2757, %v2756
        %v2953 = vpack.c.b16 %v2759, %v2758
        %v2954 = vpack.c.b16 %v2761, %v2760
        %v2955 = vpack.c.b16 %v2763, %v2762
        %v2956 = vpack.c.b16 %v2765, %v2764
        %v2957 = vpack.c.b16 %v2767, %v2766
        %v2958 = vpack.c.b16 %v2769, %v2768
        %v2959 = vpack.c.b16 %v2771, %v2770
        %v2960 = vpack.c.b16 %v2773, %v2772
        %v2961 = vpack.c.b16 %v2775, %v2774
        %v2962 = vpack.c.b16 %v2777, %v2776
        %v2963 = vpack.c.b16 %v2779, %v2778
        %v2964 = vpack.c.b16 %v2781, %v2780
        %v2965 = vpack.c.b16 %v2783, %v2782
        %v2966 = vpack.c.b16 %v2785, %v2784
        %v2967 = vpack.c.b16 %v2787, %v2786
        %v2968 = vpack.c.b16 %v2789, %v2788
        %v2969 = vpack.c.b16 %v2791, %v2790
        %v2970 = vpack.c.b16 %v2793, %v2792
        %v2971 = vpack.c.b16 %v2795, %v2794
        %v2972 = vpack.c.b16 %v2797, %v2796
        %v2973 = vpack.c.b16 %v2799, %v2798
        %v2974 = vpack.c.b16 %v2801, %v2800
        %v2975 = vpack.c.b16 %v2803, %v2802
        %v2976 = vpack.c.b16 %v2805, %v2804
        %v2977 = vpack.c.b16 %v2807, %v2806
        %v2978 = vpack.c.b16 %v2809, %v2808
        %v2979 = vpack.c.b16 %v2811, %v2810
        %v2980 = vpack.c.b16 %v2813, %v2812
        %v2981 = vpack.c.b16 %v2815, %v2814
        %v2982 = vpack.c.b16 %v2817, %v2816
        %v2983 = vpack.c.b16 %v2819, %v2818
        %v2984 = vpack.c.b16 %v2821, %v2820
        %v2985 = vpack.c.b16 %v2823, %v2822
        %v2986 = vpack.c.b16 %v2825, %v2824
        %v2987 = vpack.c.b16 %v2827, %v2826
        %v2988 = vpack.c.b16 %v2829, %v2828
        %v2989 = vpack.c.b16 %v2831, %v2830
        %v2990 = vpack.c.b16 %v2833, %v2832
        %v2991 = vpack.c.b16 %v2835, %v2834
        %v2992 = vpack.c.b16 %v2837, %v2836
        %v2993 = vpack.c.b16 %v2839, %v2838
        %v2994 = vpack.c.b16 %v2841, %v2840
        %v2995 = vpack.c.b16 %v2843, %v2842
        %v2996 = vpack.c.b16 %v2845, %v2844
        %v2997 = vpack.c.b16 %v2847, %v2846
        %v2998 = vpack.c.b16 %v2849, %v2848
        %v2999 = vpack.c.b16 %v2851, %v2850
        %v3000 = vpack.c.b16 %v2853, %v2852
        %v3001 = vpack.c.b16 %v2855, %v2854
        %v3002 = vpack.c.b16 %v2857, %v2856
        %v3003 = vpack.c.b16 %v2859, %v2858
        %v3004 = vpack.c.b16 %v2861, %v2860
        %v3005 = vpack.c.b16 %v2863, %v2862
        %v3006 = vpack.c.b16 %v2865, %v2864
        %v3007 = vpack.c.b16 %v2867, %v2866
        %v3008 = vpack.c.b16 %v2869, %v2868
        %v3009 = vpack.c.b16 %v2871, %v2870
        %v3010 = vpack.c.b16 %v2873, %v2872
        %v3011 = vpack.c.b16 %v2875, %v2874
        %v3012 = vpack.c.b16 %v2877, %v2876
        %v3013 = vpack.c.b16 %v2879, %v2878
        %v3014 = vpack.c.b16 %v2881, %v2880
        %v3015 = vpack.c.b16 %v2883, %v2882
        %v3016 = vpack.c.b16 %v2885, %v2884
        %v3017 = vpack.c.b16 %v2887, %v2886
        %v3018 = vpack.c.b16 %v2889, %v2888
        %v3019 = vpack.c.b16 %v2891, %v2890
        %3148 = vmatprep.subr.bf16.mxu0 0
        %3149 = vmatpush1.bf16.msra.mxu0 %v2899
        %3150 = vmatprep.subr.bf16.mxu0 0
        %3151 = vmatpush1.bf16.msra.mxu0 %v2898
        %3152 = vmatprep.subr.bf16.mxu0 0
        %3153 = vmatpush1.bf16.msra.mxu0 %v2897
        %3154 = vmatprep.subr.bf16.mxu0 0
        %3155 = vmatpush1.bf16.msra.mxu0 %v2896
        %3156 = vmatprep.subr.bf16.mxu0 0
        %3157 = vmatpush1.bf16.msra.mxu0 %v2895
        %3158 = vmatprep.subr.bf16.mxu0 0
        %3159 = vmatpush1.bf16.msra.mxu0 %v2894
        %3160 = vmatprep.subr.bf16.mxu0 0
        %3161 = vmatpush1.bf16.msra.mxu0 %v2893
        %3162 = vmatprep.subr.bf16.mxu0 0
        %3163 = vmatpush1.bf16.msra.mxu0 %v2892
        %3164 = vmatprep.subr.bf16.mxu0 0
        %3165 = vmatpush2.bf16.msra.mxu0 %v2907
        %3166 = vmatprep.subr.bf16.mxu0 0
        %3167 = vmatpush2.bf16.msra.mxu0 %v2906
        %3168 = vmatprep.subr.bf16.mxu0 0
        %3169 = vmatpush2.bf16.msra.mxu0 %v2905
        %3170 = vmatprep.subr.bf16.mxu0 0
        %3171 = vmatpush2.bf16.msra.mxu0 %v2904
        %3172 = vmatprep.subr.bf16.mxu0 0
        %3173 = vmatpush2.bf16.msra.mxu0 %v2903
        %3174 = vmatprep.subr.bf16.mxu0 0
        %3175 = vmatpush2.bf16.msra.mxu0 %v2902
        %3176 = vmatprep.subr.bf16.mxu0 0
        %3177 = vmatpush2.bf16.msra.mxu0 %v2901
        %3178 = vmatprep.subr.bf16.mxu0 0
        %3179 = vmatpush2.bf16.msra.mxu0 %v2900
        %3180 = vmatprep.mubr.bf16.mxu0 %v965
        %3181 = vmatmul.mubr.bf16.gmra.mxu0 %v964
        %v3182 = vpop.f32.mrf.mxu0
        %v3183 = vadd.f32 %v2350, %v3182
        %v3184 = vpop.f32.mrf.mxu0
        %v3185 = vpop.f32.mrf.mxu0
        %v3186 = vadd.f32 %v2353, %v3185
        %v3187 = vpop.f32.mrf.mxu0
        %3188 = vmatprep.mubr.bf16.mxu0 %v981
        %3189 = vmatmul.mubr.bf16.gmra.mxu0 %v980
        %v3190 = vpop.f32.mrf.mxu0
        %v3191 = vadd.f32 %v2358, %v3190
        %v3192 = vpop.f32.mrf.mxu0
        %v3193 = vpop.f32.mrf.mxu0
        %v3194 = vadd.f32 %v2361, %v3193
        %v3195 = vpop.f32.mrf.mxu0
        %3196 = vmatprep.mubr.bf16.mxu0 %v997
        %3197 = vmatmul.mubr.bf16.gmra.mxu0 %v996
        %v3198 = vpop.f32.mrf.mxu0
        %v3199 = vadd.f32 %v2366, %v3198
        %v3200 = vpop.f32.mrf.mxu0
        %v3201 = vpop.f32.mrf.mxu0
        %v3202 = vadd.f32 %v2369, %v3201
        %v3203 = vpop.f32.mrf.mxu0
        %3204 = vmatprep.mubr.bf16.mxu0 %v1013
        %3205 = vmatmul.mubr.bf16.gmra.mxu0 %v1012
        %v3206 = vpop.f32.mrf.mxu0
        %v3207 = vadd.f32 %v2374, %v3206
        %v3208 = vpop.f32.mrf.mxu0
        %v3209 = vpop.f32.mrf.mxu0
        %v3210 = vadd.f32 %v2377, %v3209
        %v3211 = vpop.f32.mrf.mxu0
        %3212 = vdwg.mxu0
        %3213 = vmatprep.subr.bf16.mxu0 0
        %3214 = vmatpush1.bf16.msra.mxu0 %v2915
        %3215 = vmatprep.subr.bf16.mxu0 0
        %3216 = vmatpush1.bf16.msra.mxu0 %v2914
        %3217 = vmatprep.subr.bf16.mxu0 0
        %3218 = vmatpush1.bf16.msra.mxu0 %v2913
        %3219 = vmatprep.subr.bf16.mxu0 0
        %3220 = vmatpush1.bf16.msra.mxu0 %v2912
        %3221 = vmatprep.subr.bf16.mxu0 0
        %3222 = vmatpush1.bf16.msra.mxu0 %v2911
        %3223 = vmatprep.subr.bf16.mxu0 0
        %3224 = vmatpush1.bf16.msra.mxu0 %v2910
        %3225 = vmatprep.subr.bf16.mxu0 0
        %3226 = vmatpush1.bf16.msra.mxu0 %v2909
        %3227 = vmatprep.subr.bf16.mxu0 0
        %3228 = vmatpush1.bf16.msra.mxu0 %v2908
        %3229 = vmatprep.subr.bf16.mxu0 0
        %3230 = vmatpush2.bf16.msra.mxu0 %v2923
        %3231 = vmatprep.subr.bf16.mxu0 0
        %3232 = vmatpush2.bf16.msra.mxu0 %v2922
        %3233 = vmatprep.subr.bf16.mxu0 0
        %3234 = vmatpush2.bf16.msra.mxu0 %v2921
        %3235 = vmatprep.subr.bf16.mxu0 0
        %3236 = vmatpush2.bf16.msra.mxu0 %v2920
        %3237 = vmatprep.subr.bf16.mxu0 0
        %3238 = vmatpush2.bf16.msra.mxu0 %v2919
        %3239 = vmatprep.subr.bf16.mxu0 0
        %3240 = vmatpush2.bf16.msra.mxu0 %v2918
        %3241 = vmatprep.subr.bf16.mxu0 0
        %3242 = vmatpush2.bf16.msra.mxu0 %v2917
        %3243 = vmatprep.subr.bf16.mxu0 0
        %3244 = vmatpush2.bf16.msra.mxu0 %v2916
        %3245 = vmatprep.mubr.bf16.mxu0 %v967
        %3246 = vmatmul.mubr.bf16.gmra.mxu0 %v966
        %v3247 = vpop.f32.mrf.mxu0
        %v3248 = vadd.f32 %v3183, %v3247
        %v3249 = vpop.f32.mrf.mxu0
        %v3250 = vpop.f32.mrf.mxu0
        %v3251 = vadd.f32 %v3186, %v3250
        %v3252 = vpop.f32.mrf.mxu0
        %3253 = vmatprep.mubr.bf16.mxu0 %v983
        %3254 = vmatmul.mubr.bf16.gmra.mxu0 %v982
        %v3255 = vpop.f32.mrf.mxu0
        %v3256 = vadd.f32 %v3191, %v3255
        %v3257 = vpop.f32.mrf.mxu0
        %v3258 = vpop.f32.mrf.mxu0
        %v3259 = vadd.f32 %v3194, %v3258
        %v3260 = vpop.f32.mrf.mxu0
        %3261 = vmatprep.mubr.bf16.mxu0 %v999
        %3262 = vmatmul.mubr.bf16.gmra.mxu0 %v998
        %v3263 = vpop.f32.mrf.mxu0
        %v3264 = vadd.f32 %v3199, %v3263
        %v3265 = vpop.f32.mrf.mxu0
        %v3266 = vpop.f32.mrf.mxu0
        %v3267 = vadd.f32 %v3202, %v3266
        %v3268 = vpop.f32.mrf.mxu0
        %3269 = vmatprep.mubr.bf16.mxu0 %v1015
        %3270 = vmatmul.mubr.bf16.gmra.mxu0 %v1014
        %v3271 = vpop.f32.mrf.mxu0
        %v3272 = vadd.f32 %v3207, %v3271
        %v3273 = vpop.f32.mrf.mxu0
        %v3274 = vpop.f32.mrf.mxu0
        %v3275 = vadd.f32 %v3210, %v3274
        %v3276 = vpop.f32.mrf.mxu0
        %3277 = vdwg.mxu0
        %3278 = vmatprep.subr.bf16.mxu0 0
        %3279 = vmatpush1.bf16.msra.mxu0 %v2931
        %3280 = vmatprep.subr.bf16.mxu0 0
        %3281 = vmatpush1.bf16.msra.mxu0 %v2930
        %3282 = vmatprep.subr.bf16.mxu0 0
        %3283 = vmatpush1.bf16.msra.mxu0 %v2929
        %3284 = vmatprep.subr.bf16.mxu0 0
        %3285 = vmatpush1.bf16.msra.mxu0 %v2928
        %3286 = vmatprep.subr.bf16.mxu0 0
        %3287 = vmatpush1.bf16.msra.mxu0 %v2927
        %3288 = vmatprep.subr.bf16.mxu0 0
        %3289 = vmatpush1.bf16.msra.mxu0 %v2926
        %3290 = vmatprep.subr.bf16.mxu0 0
        %3291 = vmatpush1.bf16.msra.mxu0 %v2925
        %3292 = vmatprep.subr.bf16.mxu0 0
        %3293 = vmatpush1.bf16.msra.mxu0 %v2924
        %3294 = vmatprep.subr.bf16.mxu0 0
        %3295 = vmatpush2.bf16.msra.mxu0 %v2939
        %3296 = vmatprep.subr.bf16.mxu0 0
        %3297 = vmatpush2.bf16.msra.mxu0 %v2938
        %3298 = vmatprep.subr.bf16.mxu0 0
        %3299 = vmatpush2.bf16.msra.mxu0 %v2937
        %3300 = vmatprep.subr.bf16.mxu0 0
        %3301 = vmatpush2.bf16.msra.mxu0 %v2936
        %3302 = vmatprep.subr.bf16.mxu0 0
        %3303 = vmatpush2.bf16.msra.mxu0 %v2935
        %3304 = vmatprep.subr.bf16.mxu0 0
        %3305 = vmatpush2.bf16.msra.mxu0 %v2934
        %3306 = vmatprep.subr.bf16.mxu0 0
        %3307 = vmatpush2.bf16.msra.mxu0 %v2933
        %3308 = vmatprep.subr.bf16.mxu0 0
        %3309 = vmatpush2.bf16.msra.mxu0 %v2932
        %3310 = vmatprep.mubr.bf16.mxu0 %v969
        %3311 = vmatmul.mubr.bf16.gmra.mxu0 %v968
        %v3312 = vpop.f32.mrf.mxu0
        %v3313 = vadd.f32 %v3248, %v3312
        %v3314 = vpop.f32.mrf.mxu0
        %v3315 = vpop.f32.mrf.mxu0
        %v3316 = vadd.f32 %v3251, %v3315
        %v3317 = vpop.f32.mrf.mxu0
        %3318 = vmatprep.mubr.bf16.mxu0 %v985
        %3319 = vmatmul.mubr.bf16.gmra.mxu0 %v984
        %v3320 = vpop.f32.mrf.mxu0
        %v3321 = vadd.f32 %v3256, %v3320
        %v3322 = vpop.f32.mrf.mxu0
        %v3323 = vpop.f32.mrf.mxu0
        %v3324 = vadd.f32 %v3259, %v3323
        %v3325 = vpop.f32.mrf.mxu0
        %3326 = vmatprep.mubr.bf16.mxu0 %v1001
        %3327 = vmatmul.mubr.bf16.gmra.mxu0 %v1000
        %v3328 = vpop.f32.mrf.mxu0
        %v3329 = vadd.f32 %v3264, %v3328
        %v3330 = vpop.f32.mrf.mxu0
        %v3331 = vpop.f32.mrf.mxu0
        %v3332 = vadd.f32 %v3267, %v3331
        %v3333 = vpop.f32.mrf.mxu0
        %3334 = vmatprep.mubr.bf16.mxu0 %v1017
        %3335 = vmatmul.mubr.bf16.gmra.mxu0 %v1016
        %v3336 = vpop.f32.mrf.mxu0
        %v3337 = vadd.f32 %v3272, %v3336
        %v3338 = vpop.f32.mrf.mxu0
        %v3339 = vpop.f32.mrf.mxu0
        %v3340 = vadd.f32 %v3275, %v3339
        %v3341 = vpop.f32.mrf.mxu0
        %3342 = vdwg.mxu0
        %3343 = vmatprep.subr.bf16.mxu0 0
        %3344 = vmatpush1.bf16.msra.mxu0 %v2947
        %3345 = vmatprep.subr.bf16.mxu0 0
        %3346 = vmatpush1.bf16.msra.mxu0 %v2946
        %3347 = vmatprep.subr.bf16.mxu0 0
        %3348 = vmatpush1.bf16.msra.mxu0 %v2945
        %3349 = vmatprep.subr.bf16.mxu0 0
        %3350 = vmatpush1.bf16.msra.mxu0 %v2944
        %3351 = vmatprep.subr.bf16.mxu0 0
        %3352 = vmatpush1.bf16.msra.mxu0 %v2943
        %3353 = vmatprep.subr.bf16.mxu0 0
        %3354 = vmatpush1.bf16.msra.mxu0 %v2942
        %3355 = vmatprep.subr.bf16.mxu0 0
        %3356 = vmatpush1.bf16.msra.mxu0 %v2941
        %3357 = vmatprep.subr.bf16.mxu0 0
        %3358 = vmatpush1.bf16.msra.mxu0 %v2940
        %3359 = vmatprep.subr.bf16.mxu0 0
        %3360 = vmatpush2.bf16.msra.mxu0 %v2955
        %3361 = vmatprep.subr.bf16.mxu0 0
        %3362 = vmatpush2.bf16.msra.mxu0 %v2954
        %3363 = vmatprep.subr.bf16.mxu0 0
        %3364 = vmatpush2.bf16.msra.mxu0 %v2953
        %3365 = vmatprep.subr.bf16.mxu0 0
        %3366 = vmatpush2.bf16.msra.mxu0 %v2952
        %3367 = vmatprep.subr.bf16.mxu0 0
        %3368 = vmatpush2.bf16.msra.mxu0 %v2951
        %3369 = vmatprep.subr.bf16.mxu0 0
        %3370 = vmatpush2.bf16.msra.mxu0 %v2950
        %3371 = vmatprep.subr.bf16.mxu0 0
        %3372 = vmatpush2.bf16.msra.mxu0 %v2949
        %3373 = vmatprep.subr.bf16.mxu0 0
        %3374 = vmatpush2.bf16.msra.mxu0 %v2948
        %3375 = vmatprep.mubr.bf16.mxu0 %v971
        %3376 = vmatmul.mubr.bf16.gmra.mxu0 %v970
        %v3377 = vpop.f32.mrf.mxu0
        %v3378 = vadd.f32 %v3313, %v3377
        %v3379 = vpop.f32.mrf.mxu0
        %v3380 = vpop.f32.mrf.mxu0
        %v3381 = vadd.f32 %v3316, %v3380
        %v3382 = vpop.f32.mrf.mxu0
        %3383 = vmatprep.mubr.bf16.mxu0 %v987
        %3384 = vmatmul.mubr.bf16.gmra.mxu0 %v986
        %v3385 = vpop.f32.mrf.mxu0
        %v3386 = vadd.f32 %v3321, %v3385
        %v3387 = vpop.f32.mrf.mxu0
        %v3388 = vpop.f32.mrf.mxu0
        %v3389 = vadd.f32 %v3324, %v3388
        %v3390 = vpop.f32.mrf.mxu0
        %3391 = vmatprep.mubr.bf16.mxu0 %v1003
        %3392 = vmatmul.mubr.bf16.gmra.mxu0 %v1002
        %v3393 = vpop.f32.mrf.mxu0
        %v3394 = vadd.f32 %v3329, %v3393
        %v3395 = vpop.f32.mrf.mxu0
        %v3396 = vpop.f32.mrf.mxu0
        %v3397 = vadd.f32 %v3332, %v3396
        %v3398 = vpop.f32.mrf.mxu0
        %3399 = vmatprep.mubr.bf16.mxu0 %v1019
        %3400 = vmatmul.mubr.bf16.gmra.mxu0 %v1018
        %v3401 = vpop.f32.mrf.mxu0
        %v3402 = vadd.f32 %v3337, %v3401
        %v3403 = vpop.f32.mrf.mxu0
        %v3404 = vpop.f32.mrf.mxu0
        %v3405 = vadd.f32 %v3340, %v3404
        %v3406 = vpop.f32.mrf.mxu0
        %3407 = vdwg.mxu0
        %3408 = vmatprep.subr.bf16.mxu0 0
        %3409 = vmatpush1.bf16.msra.mxu0 %v2963
        %3410 = vmatprep.subr.bf16.mxu0 0
        %3411 = vmatpush1.bf16.msra.mxu0 %v2962
        %3412 = vmatprep.subr.bf16.mxu0 0
        %3413 = vmatpush1.bf16.msra.mxu0 %v2961
        %3414 = vmatprep.subr.bf16.mxu0 0
        %3415 = vmatpush1.bf16.msra.mxu0 %v2960
        %3416 = vmatprep.subr.bf16.mxu0 0
        %3417 = vmatpush1.bf16.msra.mxu0 %v2959
        %3418 = vmatprep.subr.bf16.mxu0 0
        %3419 = vmatpush1.bf16.msra.mxu0 %v2958
        %3420 = vmatprep.subr.bf16.mxu0 0
        %3421 = vmatpush1.bf16.msra.mxu0 %v2957
        %3422 = vmatprep.subr.bf16.mxu0 0
        %3423 = vmatpush1.bf16.msra.mxu0 %v2956
        %3424 = vmatprep.subr.bf16.mxu0 0
        %3425 = vmatpush2.bf16.msra.mxu0 %v2971
        %3426 = vmatprep.subr.bf16.mxu0 0
        %3427 = vmatpush2.bf16.msra.mxu0 %v2970
        %3428 = vmatprep.subr.bf16.mxu0 0
        %3429 = vmatpush2.bf16.msra.mxu0 %v2969
        %3430 = vmatprep.subr.bf16.mxu0 0
        %3431 = vmatpush2.bf16.msra.mxu0 %v2968
        %3432 = vmatprep.subr.bf16.mxu0 0
        %3433 = vmatpush2.bf16.msra.mxu0 %v2967
        %3434 = vmatprep.subr.bf16.mxu0 0
        %3435 = vmatpush2.bf16.msra.mxu0 %v2966
        %3436 = vmatprep.subr.bf16.mxu0 0
        %3437 = vmatpush2.bf16.msra.mxu0 %v2965
        %3438 = vmatprep.subr.bf16.mxu0 0
        %3439 = vmatpush2.bf16.msra.mxu0 %v2964
        %3440 = vmatprep.mubr.bf16.mxu0 %v973
        %3441 = vmatmul.mubr.bf16.gmra.mxu0 %v972
        %v3442 = vpop.f32.mrf.mxu0
        %v3443 = vadd.f32 %v3378, %v3442
        %v3444 = vpop.f32.mrf.mxu0
        %v3445 = vpop.f32.mrf.mxu0
        %v3446 = vadd.f32 %v3381, %v3445
        %v3447 = vpop.f32.mrf.mxu0
        %3448 = vmatprep.mubr.bf16.mxu0 %v989
        %3449 = vmatmul.mubr.bf16.gmra.mxu0 %v988
        %v3450 = vpop.f32.mrf.mxu0
        %v3451 = vadd.f32 %v3386, %v3450
        %v3452 = vpop.f32.mrf.mxu0
        %v3453 = vpop.f32.mrf.mxu0
        %v3454 = vadd.f32 %v3389, %v3453
        %v3455 = vpop.f32.mrf.mxu0
        %3456 = vmatprep.mubr.bf16.mxu0 %v1005
        %3457 = vmatmul.mubr.bf16.gmra.mxu0 %v1004
        %v3458 = vpop.f32.mrf.mxu0
        %v3459 = vadd.f32 %v3394, %v3458
        %v3460 = vpop.f32.mrf.mxu0
        %v3461 = vpop.f32.mrf.mxu0
        %v3462 = vadd.f32 %v3397, %v3461
        %v3463 = vpop.f32.mrf.mxu0
        %3464 = vmatprep.mubr.bf16.mxu0 %v1021
        %3465 = vmatmul.mubr.bf16.gmra.mxu0 %v1020
        %v3466 = vpop.f32.mrf.mxu0
        %v3467 = vadd.f32 %v3402, %v3466
        %v3468 = vpop.f32.mrf.mxu0
        %v3469 = vpop.f32.mrf.mxu0
        %v3470 = vadd.f32 %v3405, %v3469
        %v3471 = vpop.f32.mrf.mxu0
        %3472 = vdwg.mxu0
        %3473 = vmatprep.subr.bf16.mxu0 0
        %3474 = vmatpush1.bf16.msra.mxu0 %v2979
        %3475 = vmatprep.subr.bf16.mxu0 0
        %3476 = vmatpush1.bf16.msra.mxu0 %v2978
        %3477 = vmatprep.subr.bf16.mxu0 0
        %3478 = vmatpush1.bf16.msra.mxu0 %v2977
        %3479 = vmatprep.subr.bf16.mxu0 0
        %3480 = vmatpush1.bf16.msra.mxu0 %v2976
        %3481 = vmatprep.subr.bf16.mxu0 0
        %3482 = vmatpush1.bf16.msra.mxu0 %v2975
        %3483 = vmatprep.subr.bf16.mxu0 0
        %3484 = vmatpush1.bf16.msra.mxu0 %v2974
        %3485 = vmatprep.subr.bf16.mxu0 0
        %3486 = vmatpush1.bf16.msra.mxu0 %v2973
        %3487 = vmatprep.subr.bf16.mxu0 0
        %3488 = vmatpush1.bf16.msra.mxu0 %v2972
        %3489 = vmatprep.subr.bf16.mxu0 0
        %3490 = vmatpush2.bf16.msra.mxu0 %v2987
        %3491 = vmatprep.subr.bf16.mxu0 0
        %3492 = vmatpush2.bf16.msra.mxu0 %v2986
        %3493 = vmatprep.subr.bf16.mxu0 0
        %3494 = vmatpush2.bf16.msra.mxu0 %v2985
        %3495 = vmatprep.subr.bf16.mxu0 0
        %3496 = vmatpush2.bf16.msra.mxu0 %v2984
        %3497 = vmatprep.subr.bf16.mxu0 0
        %3498 = vmatpush2.bf16.msra.mxu0 %v2983
        %3499 = vmatprep.subr.bf16.mxu0 0
        %3500 = vmatpush2.bf16.msra.mxu0 %v2982
        %3501 = vmatprep.subr.bf16.mxu0 0
        %3502 = vmatpush2.bf16.msra.mxu0 %v2981
        %3503 = vmatprep.subr.bf16.mxu0 0
        %3504 = vmatpush2.bf16.msra.mxu0 %v2980
        %3505 = vmatprep.mubr.bf16.mxu0 %v975
        %3506 = vmatmul.mubr.bf16.gmra.mxu0 %v974
        %v3507 = vpop.f32.mrf.mxu0
        %v3508 = vadd.f32 %v3443, %v3507
        %v3509 = vpop.f32.mrf.mxu0
        %v3510 = vpop.f32.mrf.mxu0
        %v3511 = vadd.f32 %v3446, %v3510
        %v3512 = vpop.f32.mrf.mxu0
        %3513 = vmatprep.mubr.bf16.mxu0 %v991
        %3514 = vmatmul.mubr.bf16.gmra.mxu0 %v990
        %v3515 = vpop.f32.mrf.mxu0
        %v3516 = vadd.f32 %v3451, %v3515
        %v3517 = vpop.f32.mrf.mxu0
        %v3518 = vpop.f32.mrf.mxu0
        %v3519 = vadd.f32 %v3454, %v3518
        %v3520 = vpop.f32.mrf.mxu0
        %3521 = vmatprep.mubr.bf16.mxu0 %v1007
        %3522 = vmatmul.mubr.bf16.gmra.mxu0 %v1006
        %v3523 = vpop.f32.mrf.mxu0
        %v3524 = vadd.f32 %v3459, %v3523
        %v3525 = vpop.f32.mrf.mxu0
        %v3526 = vpop.f32.mrf.mxu0
        %v3527 = vadd.f32 %v3462, %v3526
        %v3528 = vpop.f32.mrf.mxu0
        %3529 = vmatprep.mubr.bf16.mxu0 %v1023
        %3530 = vmatmul.mubr.bf16.gmra.mxu0 %v1022
        %v3531 = vpop.f32.mrf.mxu0
        %v3532 = vadd.f32 %v3467, %v3531
        %v3533 = vpop.f32.mrf.mxu0
        %v3534 = vpop.f32.mrf.mxu0
        %v3535 = vadd.f32 %v3470, %v3534
        %v3536 = vpop.f32.mrf.mxu0
        %3537 = vdwg.mxu0
        %3538 = vmatprep.subr.bf16.mxu0 0
        %3539 = vmatpush1.bf16.msra.mxu0 %v2995
        %3540 = vmatprep.subr.bf16.mxu0 0
        %3541 = vmatpush1.bf16.msra.mxu0 %v2994
        %3542 = vmatprep.subr.bf16.mxu0 0
        %3543 = vmatpush1.bf16.msra.mxu0 %v2993
        %3544 = vmatprep.subr.bf16.mxu0 0
        %3545 = vmatpush1.bf16.msra.mxu0 %v2992
        %3546 = vmatprep.subr.bf16.mxu0 0
        %3547 = vmatpush1.bf16.msra.mxu0 %v2991
        %3548 = vmatprep.subr.bf16.mxu0 0
        %3549 = vmatpush1.bf16.msra.mxu0 %v2990
        %3550 = vmatprep.subr.bf16.mxu0 0
        %3551 = vmatpush1.bf16.msra.mxu0 %v2989
        %3552 = vmatprep.subr.bf16.mxu0 0
        %3553 = vmatpush1.bf16.msra.mxu0 %v2988
        %3554 = vmatprep.subr.bf16.mxu0 0
        %3555 = vmatpush2.bf16.msra.mxu0 %v3003
        %3556 = vmatprep.subr.bf16.mxu0 0
        %3557 = vmatpush2.bf16.msra.mxu0 %v3002
        %3558 = vmatprep.subr.bf16.mxu0 0
        %3559 = vmatpush2.bf16.msra.mxu0 %v3001
        %3560 = vmatprep.subr.bf16.mxu0 0
        %3561 = vmatpush2.bf16.msra.mxu0 %v3000
        %3562 = vmatprep.subr.bf16.mxu0 0
        %3563 = vmatpush2.bf16.msra.mxu0 %v2999
        %3564 = vmatprep.subr.bf16.mxu0 0
        %3565 = vmatpush2.bf16.msra.mxu0 %v2998
        %3566 = vmatprep.subr.bf16.mxu0 0
        %3567 = vmatpush2.bf16.msra.mxu0 %v2997
        %3568 = vmatprep.subr.bf16.mxu0 0
        %3569 = vmatpush2.bf16.msra.mxu0 %v2996
        %3570 = vmatprep.mubr.bf16.mxu0 %v977
        %3571 = vmatmul.mubr.bf16.gmra.mxu0 %v976
        %v3572 = vpop.f32.mrf.mxu0
        %v3573 = vadd.f32 %v3508, %v3572
        %v3574 = vpop.f32.mrf.mxu0
        %v3575 = vpop.f32.mrf.mxu0
        %v3576 = vadd.f32 %v3511, %v3575
        %v3577 = vpop.f32.mrf.mxu0
        %3578 = vmatprep.mubr.bf16.mxu0 %v993
        %3579 = vmatmul.mubr.bf16.gmra.mxu0 %v992
        %v3580 = vpop.f32.mrf.mxu0
        %v3581 = vadd.f32 %v3516, %v3580
        %v3582 = vpop.f32.mrf.mxu0
        %v3583 = vpop.f32.mrf.mxu0
        %v3584 = vadd.f32 %v3519, %v3583
        %v3585 = vpop.f32.mrf.mxu0
        %3586 = vmatprep.mubr.bf16.mxu0 %v1009
        %3587 = vmatmul.mubr.bf16.gmra.mxu0 %v1008
        %v3588 = vpop.f32.mrf.mxu0
        %v3589 = vadd.f32 %v3524, %v3588
        %v3590 = vpop.f32.mrf.mxu0
        %v3591 = vpop.f32.mrf.mxu0
        %v3592 = vadd.f32 %v3527, %v3591
        %v3593 = vpop.f32.mrf.mxu0
        %3594 = vmatprep.mubr.bf16.mxu0 %v1025
        %3595 = vmatmul.mubr.bf16.gmra.mxu0 %v1024
        %v3596 = vpop.f32.mrf.mxu0
        %v3597 = vadd.f32 %v3532, %v3596
        %v3598 = vpop.f32.mrf.mxu0
        %v3599 = vpop.f32.mrf.mxu0
        %v3600 = vadd.f32 %v3535, %v3599
        %v3601 = vpop.f32.mrf.mxu0
        %3602 = vdwg.mxu0
        %3603 = vmatprep.subr.bf16.mxu0 0
        %3604 = vmatpush1.bf16.msra.mxu0 %v3011
        %3605 = vmatprep.subr.bf16.mxu0 0
        %3606 = vmatpush1.bf16.msra.mxu0 %v3010
        %3607 = vmatprep.subr.bf16.mxu0 0
        %3608 = vmatpush1.bf16.msra.mxu0 %v3009
        %3609 = vmatprep.subr.bf16.mxu0 0
        %3610 = vmatpush1.bf16.msra.mxu0 %v3008
        %3611 = vmatprep.subr.bf16.mxu0 0
        %3612 = vmatpush1.bf16.msra.mxu0 %v3007
        %3613 = vmatprep.subr.bf16.mxu0 0
        %3614 = vmatpush1.bf16.msra.mxu0 %v3006
        %3615 = vmatprep.subr.bf16.mxu0 0
        %3616 = vmatpush1.bf16.msra.mxu0 %v3005
        %3617 = vmatprep.subr.bf16.mxu0 0
        %3618 = vmatpush1.bf16.msra.mxu0 %v3004
        %3619 = vmatprep.subr.bf16.mxu0 0
        %3620 = vmatpush2.bf16.msra.mxu0 %v3019
        %3621 = vmatprep.subr.bf16.mxu0 0
        %3622 = vmatpush2.bf16.msra.mxu0 %v3018
        %3623 = vmatprep.subr.bf16.mxu0 0
        %3624 = vmatpush2.bf16.msra.mxu0 %v3017
        %3625 = vmatprep.subr.bf16.mxu0 0
        %3626 = vmatpush2.bf16.msra.mxu0 %v3016
        %3627 = vmatprep.subr.bf16.mxu0 0
        %3628 = vmatpush2.bf16.msra.mxu0 %v3015
        %3629 = vmatprep.subr.bf16.mxu0 0
        %3630 = vmatpush2.bf16.msra.mxu0 %v3014
        %3631 = vmatprep.subr.bf16.mxu0 0
        %3632 = vmatpush2.bf16.msra.mxu0 %v3013
        %3633 = vmatprep.subr.bf16.mxu0 0
        %3634 = vmatpush2.bf16.msra.mxu0 %v3012
        %3635 = vmatprep.mubr.bf16.mxu0 %v979
        %3636 = vmatmul.mubr.bf16.gmra.mxu0 %v978
        %v3637 = vpop.f32.mrf.mxu0
        %v3638 = vadd.f32 %v3573, %v3637
        %v3639 = vpop.f32.mrf.mxu0
        %v3640 = vpop.f32.mrf.mxu0
        %v3641 = vadd.f32 %v3576, %v3640
        %v3642 = vpop.f32.mrf.mxu0
        %3643 = vmatprep.mubr.bf16.mxu0 %v995
        %3644 = vmatmul.mubr.bf16.gmra.mxu0 %v994
        %v3645 = vpop.f32.mrf.mxu0
        %v3646 = vadd.f32 %v3581, %v3645
        %v3647 = vpop.f32.mrf.mxu0
        %v3648 = vpop.f32.mrf.mxu0
        %v3649 = vadd.f32 %v3584, %v3648
        %v3650 = vpop.f32.mrf.mxu0
        %3651 = vmatprep.mubr.bf16.mxu0 %v1011
        %3652 = vmatmul.mubr.bf16.gmra.mxu0 %v1010
        %v3653 = vpop.f32.mrf.mxu0
        %v3654 = vadd.f32 %v3589, %v3653
        %v3655 = vpop.f32.mrf.mxu0
        %v3656 = vpop.f32.mrf.mxu0
        %v3657 = vadd.f32 %v3592, %v3656
        %v3658 = vpop.f32.mrf.mxu0
        %3659 = vmatprep.mubr.bf16.mxu0 %v1027
        %3660 = vmatmul.mubr.bf16.gmra.mxu0 %v1026
        %v3661 = vpop.f32.mrf.mxu0
        %v3662 = vadd.f32 %v3597, %v3661
        %v3663 = vpop.f32.mrf.mxu0
        %v3664 = vpop.f32.mrf.mxu0
        %v3665 = vadd.f32 %v3600, %v3664
        %v3666 = vpop.f32.mrf.mxu0
        %3667 = vdwg.mxu0
        %vm3668 = vcmask 105472
        %v3669 = vsel %vm3668, %v3638, 0.0
        %v3670 = vsel %vm3668, %v3641, 0.0
        %v3671 = vadd.f32 %v3669, %v3670
        %v3672 = vsel %vm3668, %v3646, 0.0
        %v3673 = vadd.f32 %v3671, %v3672
        %v3674 = vsel %vm3668, %v3649, 0.0
        %v3675 = vadd.f32 %v3673, %v3674
        %v3676 = vsel %vm3668, %v3654, 0.0
        %v3677 = vadd.f32 %v3675, %v3676
        %v3678 = vsel %vm3668, %v3657, 0.0
        %v3679 = vadd.f32 %v3677, %v3678
        %v3680 = vsel %vm3668, %v3662, 0.0
        %v3681 = vadd.f32 %v3679, %v3680
        %v3682 = vsel %vm3668, %v3665, 0.0
        %v3683 = vadd.f32 %v3681, %v3682
        %v3684 = vrot.slane %v3683, 4
        %v3685 = vadd.f32 %v3683, %v3684
        %v3686 = vrot.slane %v3685, 2
        %v3687 = vadd.f32 %v3685, %v3686
        %v3688 = vrot.slane %v3687, 1
        %v3689 = vadd.f32 %v3687, %v3688
        %v3690 = vld [vmem:[%s3] sm:$0x1]
        %v3691 = vadd.f32 %v3689, %v3690
        %vm3692 = vcmask 98304
        %v3693 = vsel %vm3692, %v3691, -inf
        %3694 = vmax.xlane.f32.xlu0 %v3693
        %v3695 = vpop.xlane.xlu0 %3694
        %v3696 = vsub.f32 %v3691, %v3695
        %v3697 = vmul.f32 %v3696, 1.442695
        %v3698 = vpow.pop %v3697
        %v3699 = vsel %vm3692, %v3698, 0.0
        %3700 = vadd.xlane.f32.xlu0 %v3699
        %v3701 = vpop.xlane.xlu0 %3700
        %v3702 = vlog2.pop %v3701
        %v3703 = vmul.f32 %v3702, 0.6931472
        %v3704 = vadd.f32 %v3703, %v3695
        %v3705 = vsub.f32 %v3691, %v3704
        %3706 = vst.msk [vmem:[%s189] sm:$0x1] %vm3692, %v3705
        %s3707 = sand.u32 %s115, 1
        %s3708 = scalar_lea.sflag [#allocation3], %s3707
        %s3709 = sand.u32 %s115, 1
        %s3710 = scalar_lea.vmem [#allocation2], %s3709
        // Predicated region
        $region37: #{tpu_custom_call.1} parent=35 // pred_check
          %p3711 = pneg %p125
        $region38: #{tpu_custom_call.1} parent=35 // pred_check_branch
          %3713 = sbr.rel (%p3711) target = $region40
        $region39: #{tpu_custom_call.1} parent=35 // pred_region
          %s3715 = ssub.s32 16, 16
          %3716 = vsyncadd %s3708, %s3715
          %s3717 = smul.addr %s18, 16
          %s3718 = scalar_lea.hbm %s4, %s3717
          %s3720 = sshll.u32 %s3710, 4
          %s3721 = int_to_ptr.vmem [resolvable:$true] %s3720
          %3723 = dma.vmem_to_hbm [thread:$0]  %s3721, 16, %s3718, %s3708
        $region40: #{tpu_custom_call.1} parent=35 // pred_fallthru
          _
      $region36: #{tpu_custom_call.1} parent=5 // pred_fallthru
        _
      %p3724 = scmp.le.s32.totalorder 2, %s13
      // Predicated region
      $region41: #{tpu_custom_call.1} parent=5 // pred_check
        %p3725 = pneg %p3724
      $region42: #{tpu_custom_call.1} parent=5 // pred_check_branch
        %3727 = sbr.rel (%p3725) target = $region44
      $region43: #{tpu_custom_call.1} parent=5 // pred_region
        %s3728 = ssub.s32 %s13, 2
        // Predicated region
        $region45: #{tpu_custom_call.1} parent=43 // pred_check
          %p3729 = pneg %p131
        $region46: #{tpu_custom_call.1} parent=43 // pred_check_branch
          %3731 = sbr.rel (%p3729) target = $region48
        $region47: #{tpu_custom_call.1} parent=43 // pred_region
          %s3732 = sand.u32 %s116, 1
          %s3733 = scalar_lea.sflag [#allocation3], %s3732
          %s3734 = sand.u32 %s116, 1
          %s3735 = scalar_lea.vmem [#allocation2], %s3734
          %3736 = dma.done %s3733, 16
        $region48: #{tpu_custom_call.1} parent=43 // pred_fallthru
          _
      $region44: #{tpu_custom_call.1} parent=5 // pred_fallthru
        _
    $region6: #{tpu_custom_call.1} parent=1 // loop_footer
      %s17 = sadd.s32 1, %s13
    $region7: #{tpu_custom_call.1} parent=1 // loop_footer_branch
      %12 = sbr.rel target = $region3
    $region8: #{tpu_custom_call.1} parent=1 // loop_exit
      _
    %3737 = vsyncpa [#allocation3], 1
    %s3738 = scalar_lea.sflag [#allocation3], 1
    %3739 = vsyncpa %s3738, 1

</llo_original>
